<compile_context>
chip_gen: v7x
topology: tpu7x:2x2x1
jax: 0.10.0
libtpu: 0.0.40
codegen_flags: <defaults>
</compile_context>

<pallas_src>
import jax
import jax.numpy as jnp
from jax import lax
from jax.experimental import pallas as pl
from jax.experimental.pallas import tpu as pltpu

HEAD_DIM = 2048          # fixed by the module: nn.Linear(2048, sent_feat_dim)
LANE = 128
_MiB = 1024 * 1024


def _round_up(x, m):
    return -(-x // m) * m


def _ltr_kernel(head_ref, wh_ref, bias_ref, sent_ref, wr_ref, out_ref):
    """One roi-row tile per grid step.

    head_ref : [tr, 2048]  streamed roi tile of head_feat (bf16 preferred)
    wh_ref   : [2048, Dp]  head_fc weight, pre-transposed, bf16 (resident)
    bias_ref : [1, Dp]     head_fc bias, f32 (resident)
    sent_ref : [S, Dp]     sentence features, f32 (resident)
    wr_ref   : [1, Dp]     rank_fc weight, f32 (resident)
    out_ref  : [S, tr]     rank-score tile, f32 (lane-dense)
    """
    head = head_ref[...]
    if head.dtype != jnp.bfloat16:        # contract: upstream should emit bf16;
        head = head.astype(jnp.bfloat16)  # cast kept only as compatibility path.

    # head_fc on the MXU: bf16 operands, f32 accumulation, then bias + ReLU.
    h = jnp.dot(head, wh_ref[...], preferred_element_type=jnp.float32)   # [tr, Dp]
    h = jnp.maximum(h + bias_ref[...], 0.0)

    # rank_fc(sent[:,None,:] * H).squeeze(2) == (sent * w_rank) @ H^T.
    # (1,1)-contraction is the standard q.k^T MXU pattern (no XLU transpose of h).
    ws = (sent_ref[...] * wr_ref[...]).astype(jnp.bfloat16)              # [S, Dp]
    out_ref[...] = lax.dot_general(
        ws, h.astype(jnp.bfloat16),
        dimension_numbers=(((1,), (1,)), ((), ())),                      # contract on Dp
        preferred_element_type=jnp.float32).astype(out_ref.dtype)


def prepare_ltr_params(w_head, b_head, w_rank):
    """One-time conversion from PyTorch layout; run at weight-load time.

    Pads sent_feat_dim (D) up to a multiple of 128 with zeros so every operand
    is lane-dense; zero weight/bias/rank columns contribute exactly 0.
    """
    D = w_head.shape[0]
    Dp = _round_up(D, LANE)
    wh_t = jnp.zeros((HEAD_DIM, Dp), jnp.bfloat16).at[:, :D].set(
        jnp.asarray(w_head, jnp.float32).T.astype(jnp.bfloat16))         # [2048, Dp]
    bias2d = jnp.zeros((1, Dp), jnp.float32).at[0, :D].set(
        jnp.asarray(b_head, jnp.float32))                                # [1, Dp]
    wr2d = jnp.zeros((1, Dp), jnp.float32).at[0, :D].set(
        jnp.asarray(w_rank, jnp.float32).reshape(-1))                    # [1, Dp]
    return wh_t, bias2d, wr2d


def _two_tensorcores():
    """True on chips exposing 2 TensorCores per device (v7x / megacore)."""
    try:
        kind = jax.devices()[0].device_kind.lower()
    except Exception:
        return False
    return any(t in kind for t in ("v7", "v4", "v5p"))


def _choose_tr(Rp, two_tc):
    """Pick a roi tile (multiple of 128) that divides the padded roi count."""
    if Rp <= LANE:
        return Rp
    if two_tc:
        # >=2-4 grid steps so dimension_semantics=('parallel',) shards across
        # both TensorCores; tiles capped at 256 rows (v7x: 64 MiB VMEM).
        tr = min(256, max(LANE, _round_up(Rp // 4, LANE)))
    else:
        # Single TC, 128 MiB VMEM (v5e/v6e): bigger tiles amortize the
        # ~0.35 us/step grid overhead and lengthen head-stream DMA bursts.
        tr = min(512, Rp)
    while Rp % tr:            # terminates: 128 always divides Rp
        tr -= LANE
    return tr


def ltr_subnetwork(sent_feat, head_feat, wh_t, bias2d, wr2d, *, tr=None,
                   single_buffer_residents=None):
    """sent_feat: [S, D] f32    head_feat: [R, 2048] (bf16 preferred, f32 ok)
       wh_t/bias2d/wr2d: outputs of prepare_ltr_params (D padded to Dp).
       Returns rank_score: [S, R] float32.
    """
    S, D = sent_feat.shape
    R, K = head_feat.shape
    assert K == HEAD_DIM
    Dp = wh_t.shape[1]
    assert wh_t.shape == (HEAD_DIM, Dp) and Dp % LANE == 0 and Dp >= D
    assert bias2d.shape == (1, Dp) and wr2d.shape == (1, Dp)

    two_tc = _two_tensorcores()

    # Lane-dense layout: pad D on the (tiny) sent_feat, pad roi rows up to the
    # tile size. Zero padding is numerically exact; extra columns are sliced off.
    if Dp != D:
        sent_feat = jnp.pad(sent_feat, ((0, 0), (0, Dp - D)))
    if tr is None:
        tr = _choose_tr(_round_up(R, LANE), two_tc)
    assert tr % LANE == 0, "roi tile must be a multiple of 128 lanes"
    Rp = _round_up(R, tr)
    if Rp != R:
        head_feat = jnp.pad(head_feat, ((0, Rp - R), (0, 0)))

    grid = (Rp // tr,)

    # Rough VMEM budget (double-buffered stream + residents + output tiles);
    # raise the scoped limit only when the v5e default (16 MiB) would not fit.
    head_bytes = 2 * tr * HEAD_DIM * head_feat.dtype.itemsize
    resident_bytes = 2 * (HEAD_DIM * Dp * 2 + (S + 2) * Dp * 4)
    out_bytes = 2 * S * tr * 4
    vmem_est = int(1.25 * (head_bytes + resident_bytes + out_bytes))
    compiler_kwargs = dict(dimension_semantics=("parallel",))
    if vmem_est > 14 * _MiB:
        compiler_kwargs["vmem_limit_bytes"] = min(vmem_est + 8 * _MiB, 96 * _MiB)

    if single_buffer_residents is None:
        # Only worth it where VMEM headroom matters (v7x); harmless elsewhere.
        single_buffer_residents = two_tc and hasattr(pl, "Buffered")

    def run(use_single_buffer):
        def resident(shape):
            idx = lambda r: (0,) * len(shape)
            if use_single_buffer:
                # Constant index_map: DMA'd once; drop the dead second buffer.
                return pl.BlockSpec(shape, idx, pipeline_mode=pl.Buffered(1))
            return pl.BlockSpec(shape, idx)

        in_specs = [
            pl.BlockSpec((tr, HEAD_DIM), lambda r: (r, 0)),   # streamed head tile
            resident((HEAD_DIM, Dp)),                         # w_head^T (bf16)
            resident((1, Dp)),                                # head_fc bias
            resident((S, Dp)),                                # sent_feat
            resident((1, Dp)),                                # rank_fc weight
        ]
        return pl.pallas_call(
            _ltr_kernel,
            out_shape=jax.ShapeDtypeStruct((S, Rp), jnp.float32),
            grid_spec=pltpu.PrefetchScalarGridSpec(
                num_scalar_prefetch=0,
                grid=grid,
                in_specs=in_specs,
                out_specs=pl.BlockSpec((S, tr), lambda r: (0, r)),
            ),
            compiler_params=pltpu.CompilerParams(**compiler_kwargs),
        )(head_feat, wh_t, bias2d, sent_feat, wr2d)

    if single_buffer_residents:
        try:
            out = run(True)
        except Exception:   # pipeline_mode/Buffered unsupported by this jax build
            out = run(False)
    else:
        out = run(False)

    return out if Rp == R else out[:, :R]


def ltr_subnetwork_ref(sent_feat, head_feat, w_head, b_head, w_rank):
    """Pure-JAX f32 reference mirroring the PyTorch forward exactly."""
    mapped = jax.nn.relu(head_feat @ w_head.T + b_head)          # [R, D]
    merged = sent_feat[:, None, :] * mapped[None, :, :]          # [S, R, D]
    return jnp.einsum("srd,od->sr", merged, w_rank)              # [S, R]


if __name__ == "__main__":
    S = 8            # sent_num
    R = 8            # roi_num
    D = 32           # sent_feat_dim

    key = jax.random.PRNGKey(0)
    k1, k2, k3, k4, k5 = jax.random.split(key, 5)

    # Deterministic synthetic parameters (PyTorch nn.Linear layouts).
    w_head = jax.random.normal(k1, (D, HEAD_DIM), jnp.float32) * 0.02
    b_head = jax.random.normal(k2, (D,), jnp.float32) * 0.02
    w_rank = jax.random.normal(k3, (1, D), jnp.float32) * 0.1

    # Inputs. Production contract: the upstream head network emits bf16
    # activations, halving the dominant HBM stream into this kernel.
    sent_feat = jax.random.normal(k4, (S, D), jnp.float32)
    head_feat = jax.random.normal(k5, (R, HEAD_DIM), jnp.float32).astype(jnp.bfloat16)

    # One-time layout/dtype/padding prep (outside the hot path).
    wh_t, bias2d, wr2d = prepare_ltr_params(w_head, b_head, w_rank)

    out = ltr_subnetwork(sent_feat, head_feat, wh_t, bias2d, wr2d)
    out = jax.block_until_ready(out)

    ref = ltr_subnetwork_ref(sent_feat, head_feat.astype(jnp.float32),
                             w_head, b_head, w_rank)
    assert out.shape == (S, R)
    assert out.dtype == jnp.float32
    # Tolerance loosened vs. pure f32: MXU operands are bf16.
    assert jnp.allclose(out, ref, atol=5e-2, rtol=5e-2), \
        float(jnp.max(jnp.abs(out - ref)))

    print("KERNEL_OK")
</pallas_src>

<mosaic_0001>
module attributes {stable_mosaic.version = 11 : i64} {
  func.func @_ltr_kernel(%arg0: i32, %arg1: memref<128x2048xbf16, #tpu.memory_space<vmem>>, %arg2: memref<2048x128xbf16, #tpu.memory_space<vmem>>, %arg3: memref<1x128xf32, #tpu.memory_space<vmem>>, %arg4: memref<8x128xf32, #tpu.memory_space<vmem>>, %arg5: memref<1x128xf32, #tpu.memory_space<vmem>>, %arg6: memref<8x128xf32, #tpu.memory_space<vmem>>) attributes {dimension_semantics = [#tpu.dimension_semantics<parallel>], iteration_bounds = array<i64: 1>, scalar_prefetch = 0 : i64, scratch_operands = 0 : i64, tpu.core_type = #tpu.core_type<tc>, window_params = [{transform_indices = @transform_0, window_bounds = array<i64: 128, 2048>}, {pipeline_mode = #tpu.pipeline_mode<synchronous>, transform_indices = @transform_1, window_bounds = array<i64: 2048, 128>}, {pipeline_mode = #tpu.pipeline_mode<synchronous>, transform_indices = @transform_2, window_bounds = array<i64: 1, 128>}, {pipeline_mode = #tpu.pipeline_mode<synchronous>, transform_indices = @transform_3, window_bounds = array<i64: 8, 128>}, {pipeline_mode = #tpu.pipeline_mode<synchronous>, transform_indices = @transform_4, window_bounds = array<i64: 1, 128>}, {transform_indices = @transform_5, window_bounds = array<i64: 8, 128>}]} {
    %c0 = arith.constant 0 : index
    %c0_0 = arith.constant 0 : index
    %0 = vector.load %arg1[%c0, %c0_0] : memref<128x2048xbf16, #tpu.memory_space<vmem>>, vector<128x2048xbf16>
    %c0_1 = arith.constant 0 : index
    %c0_2 = arith.constant 0 : index
    %1 = vector.load %arg2[%c0_1, %c0_2] : memref<2048x128xbf16, #tpu.memory_space<vmem>>, vector<2048x128xbf16>
    %cst = arith.constant dense<0.000000e+00> : vector<128x128xf32>
    %2 = tpu.matmul %0, %1, %cst {dimension_numbers = #tpu.dot_dimension_numbers<[1], [0], [0], [1], [0, 0, 1, 1], [], []>} : vector<128x2048xbf16>, vector<2048x128xbf16>, vector<128x128xf32> -> vector<128x128xf32>
    %c0_3 = arith.constant 0 : index
    %c0_4 = arith.constant 0 : index
    %3 = vector.load %arg3[%c0_3, %c0_4] : memref<1x128xf32, #tpu.memory_space<vmem>>, vector<1x128xf32>
    %4 = vector.broadcast %3 : vector<1x128xf32> to vector<128x128xf32>
    %5 = arith.addf %2, %4 : vector<128x128xf32>
    %cst_5 = arith.constant 0.000000e+00 : f32
    %6 = vector.broadcast %cst_5 : f32 to vector<128x128xf32>
    %7 = arith.maximumf %5, %6 : vector<128x128xf32>
    %c0_6 = arith.constant 0 : index
    %c0_7 = arith.constant 0 : index
    %8 = vector.load %arg4[%c0_6, %c0_7] : memref<8x128xf32, #tpu.memory_space<vmem>>, vector<8x128xf32>
    %c0_8 = arith.constant 0 : index
    %c0_9 = arith.constant 0 : index
    %9 = vector.load %arg5[%c0_8, %c0_9] : memref<1x128xf32, #tpu.memory_space<vmem>>, vector<1x128xf32>
    %10 = vector.broadcast %9 : vector<1x128xf32> to vector<8x128xf32>
    %11 = arith.mulf %8, %10 : vector<8x128xf32>
    %12 = arith.truncf %11 : vector<8x128xf32> to vector<8x128xbf16>
    %13 = arith.truncf %7 : vector<128x128xf32> to vector<128x128xbf16>
    %cst_10 = arith.constant dense<0.000000e+00> : vector<8x128xf32>
    %14 = tpu.matmul %12, %13, %cst_10 {dimension_numbers = #tpu.dot_dimension_numbers<[1], [1], [0], [0], [0, 0, 1, 0], [], []>} : vector<8x128xbf16>, vector<128x128xbf16>, vector<8x128xf32> -> vector<8x128xf32>
    %c0_11 = arith.constant 0 : index
    %c0_12 = arith.constant 0 : index
    %15 = vector.load %arg6[%c0_11, %c0_12] : memref<8x128xf32, #tpu.memory_space<vmem>>, vector<8x128xf32>
    tpu.vector_store %arg6[%c0_11, %c0_12], %14 {strides = array<i32>} : memref<8x128xf32, #tpu.memory_space<vmem>>, vector<8x128xf32>,
    return
  }
  func.func @transform_0(%arg0: i32) -> (i32, i32) {
    %c0_i32 = arith.constant 0 : i32
    %c0_i32_0 = arith.constant 0 : i32
    return %arg0, %c0_i32 : i32, i32
  }
  func.func @transform_1(%arg0: i32) -> (i32, i32) {
    %c0_i32 = arith.constant 0 : i32
    %c0_i32_0 = arith.constant 0 : i32
    %c0_i32_1 = arith.constant 0 : i32
    return %c0_i32, %c0_i32_0 : i32, i32
  }
  func.func @transform_2(%arg0: i32) -> (i32, i32) {
    %c0_i32 = arith.constant 0 : i32
    %c0_i32_0 = arith.constant 0 : i32
    %c0_i32_1 = arith.constant 0 : i32
    return %c0_i32, %c0_i32_0 : i32, i32
  }
  func.func @transform_3(%arg0: i32) -> (i32, i32) {
    %c0_i32 = arith.constant 0 : i32
    %c0_i32_0 = arith.constant 0 : i32
    %c0_i32_1 = arith.constant 0 : i32
    return %c0_i32, %c0_i32_0 : i32, i32
  }
  func.func @transform_4(%arg0: i32) -> (i32, i32) {
    %c0_i32 = arith.constant 0 : i32
    %c0_i32_0 = arith.constant 0 : i32
    %c0_i32_1 = arith.constant 0 : i32
    return %c0_i32, %c0_i32_0 : i32, i32
  }
  func.func @transform_5(%arg0: i32) -> (i32, i32) {
    %c0_i32 = arith.constant 0 : i32
    %c0_i32_0 = arith.constant 0 : i32
    return %c0_i32, %arg0 : i32, i32
  }
}

</mosaic_0001>

<llo_original>
// kernel: tpu_custom_call.1
$region0: #{tpu_custom_call.1}
  #allocation0 [shape = 'u32[]', space=smem, size = 0x4, offset = 0x4, fixed_abs, tag = 'smem constant byte address 0x4 - core index']
  #allocation1 [shape = 'u32[144,128]{1,0:T(1,128)}', space=vmem, size = 0x12000, scoped, tag = 'internal scratch']
  %s0 = inlined_call_operand.hbm [shape: bf16[128,2048], index: 0, kind: input, shape index: {}]
  %s1 = inlined_call_operand.hbm [shape: bf16[2048,128], index: 1, kind: input, shape index: {}]
  %s2 = inlined_call_operand.vmem [shape: f32[1,128], index: 2, kind: input, shape index: {}]
  %s3 = inlined_call_operand.vmem [shape: f32[8,128], index: 3, kind: input, shape index: {}]
  %s4 = inlined_call_operand.vmem [shape: f32[1,128], index: 4, kind: input, shape index: {}]
  %s5 = inlined_call_operand.hbm [shape: f32[8,128], index: 5, kind: output, shape index: {}]
  %s6 = sld [smem:[#allocation0]]
  $region38: #{tpu_custom_call.1} parent=0
    _
  %s8 = ssub.s32 1, %s6
  %s9 = scalar_select 0, %s8, %s6
  $region1: #{tpu_custom_call.1} parent=0
    #allocation2 [shape = 'u8[524288]{0}', space=vmem, size = 0x80000, scoped, tag = 'input window, operand 0, single buffered']
    #allocation3 [shape = 's32[1]{0}', space=sflag, size = 0x4, scoped, tag = 'scoped memory for tpu_custom_call.1']
    #allocation4 [shape = 's32[1]{0}', space=sflag, size = 0x4, scoped, tag = 'scoped memory for tpu_custom_call.1']
    #allocation5 [shape = 'u8[524288]{0}', space=vmem, size = 0x80000, scoped, tag = 'input window, operand 1, single buffered']
    #allocation6 [shape = 's32[1]{0}', space=sflag, size = 0x4, scoped, tag = 'scoped memory for tpu_custom_call.1']
    #allocation7 [shape = 'u8[4096]{0}', space=vmem, size = 0x1000, scoped, tag = 'output window, operand 0, single buffered']
    %10 = vsyncpa [#allocation3], 0
    %11 = vsyncpa [#allocation6], 0
    %12 = vsyncpa [#allocation4], 0
    // Predicated region
    $region2: #{tpu_custom_call.1} parent=1 // pred_check
      _
    $region3: #{tpu_custom_call.1} parent=1 // pred_check_branch
      %14 = sbr.rel (0) target = $region5
    $region4: #{tpu_custom_call.1} parent=1 // pred_region
      %s16 = ssub.s32 16384, 16384
      %17 = vsyncadd [#allocation3], %s16
      %s18 = sshll.u32 [#allocation2], 4
      %s19 = int_to_ptr.vmem [resolvable:$true] %s18
      %24 = dma.hbm_to_vmem [thread:$0]  %s0, 16384, %s19, [#allocation3], 1024, 1024, 64
    $region5: #{tpu_custom_call.1} parent=1 // pred_fallthru
      _
    // Predicated region
    $region6: #{tpu_custom_call.1} parent=1 // pred_check
      _
    $region7: #{tpu_custom_call.1} parent=1 // pred_check_branch
      %26 = sbr.rel (0) target = $region9
    $region8: #{tpu_custom_call.1} parent=1 // pred_region
      %s28 = ssub.s32 16384, 16384
      %29 = vsyncadd [#allocation6], %s28
      %s30 = sshll.u32 [#allocation5], 4
      %s31 = int_to_ptr.vmem [resolvable:$true] %s30
      %36 = dma.hbm_to_vmem [thread:$0]  %s1, 16384, %s31, [#allocation6], 64, 64, 4
    $region9: #{tpu_custom_call.1} parent=1 // pred_fallthru
      _
    // Predicated region
    $region10: #{tpu_custom_call.1} parent=1 // pred_check
      _
    $region11: #{tpu_custom_call.1} parent=1 // pred_check_branch
      %38 = sbr.rel (0) target = $region13
    $region12: #{tpu_custom_call.1} parent=1 // pred_region
      _
    $region13: #{tpu_custom_call.1} parent=1 // pred_fallthru
      _
    // Predicated region
    $region14: #{tpu_custom_call.1} parent=1 // pred_check
      _
    $region15: #{tpu_custom_call.1} parent=1 // pred_check_branch
      %40 = sbr.rel (0) target = $region17
    $region16: #{tpu_custom_call.1} parent=1 // pred_region
      _
    $region17: #{tpu_custom_call.1} parent=1 // pred_fallthru
      _
    // Predicated region
    $region18: #{tpu_custom_call.1} parent=1 // pred_check
      _
    $region19: #{tpu_custom_call.1} parent=1 // pred_check_branch
      %42 = sbr.rel (0) target = $region21
    $region20: #{tpu_custom_call.1} parent=1 // pred_region
      _
    $region21: #{tpu_custom_call.1} parent=1 // pred_fallthru
      _
    // Predicated region
    $region22: #{tpu_custom_call.1} parent=1 // pred_check
      _
    $region23: #{tpu_custom_call.1} parent=1 // pred_check_branch
      %44 = sbr.rel (0) target = $region25
    $region24: #{tpu_custom_call.1} parent=1 // pred_region
      %45 = dma.done [#allocation3], 16384
    $region25: #{tpu_custom_call.1} parent=1 // pred_fallthru
      _
    // Predicated region
    $region26: #{tpu_custom_call.1} parent=1 // pred_check
      _
    $region27: #{tpu_custom_call.1} parent=1 // pred_check_branch
      %47 = sbr.rel (0) target = $region29
    $region28: #{tpu_custom_call.1} parent=1 // pred_region
      %48 = dma.done [#allocation6], 16384
    $region29: #{tpu_custom_call.1} parent=1 // pred_fallthru
      _
    %v50 = vld [vmem:[#allocation2] sm:$0xff]
    %v51 = vld [vmem:[#allocation2 + $0x8] sm:$0xff]
    %v52 = vld [vmem:[#allocation2 + $0x10] sm:$0xff]
    %v53 = vld [vmem:[#allocation2 + $0x18] sm:$0xff]
    %v54 = vld [vmem:[#allocation2 + $0x20] sm:$0xff]
    %v55 = vld [vmem:[#allocation2 + $0x28] sm:$0xff]
    %v56 = vld [vmem:[#allocation2 + $0x30] sm:$0xff]
    %v57 = vld [vmem:[#allocation2 + $0x38] sm:$0xff]
    %v58 = vld [vmem:[#allocation2 + $0x40] sm:$0xff]
    %v59 = vld [vmem:[#allocation2 + $0x48] sm:$0xff]
    %v60 = vld [vmem:[#allocation2 + $0x50] sm:$0xff]
    %v61 = vld [vmem:[#allocation2 + $0x58] sm:$0xff]
    %v62 = vld [vmem:[#allocation2 + $0x60] sm:$0xff]
    %v63 = vld [vmem:[#allocation2 + $0x68] sm:$0xff]
    %v64 = vld [vmem:[#allocation2 + $0x70] sm:$0xff]
    %v65 = vld [vmem:[#allocation2 + $0x78] sm:$0xff]
    %v66 = vld [vmem:[#allocation2 + $0x80] sm:$0xff]
    %v67 = vld [vmem:[#allocation2 + $0x88] sm:$0xff]
    %v68 = vld [vmem:[#allocation2 + $0x90] sm:$0xff]
    %v69 = vld [vmem:[#allocation2 + $0x98] sm:$0xff]
    %v70 = vld [vmem:[#allocation2 + $0xa0] sm:$0xff]
    %v71 = vld [vmem:[#allocation2 + $0xa8] sm:$0xff]
    %v72 = vld [vmem:[#allocation2 + $0xb0] sm:$0xff]
    %v73 = vld [vmem:[#allocation2 + $0xb8] sm:$0xff]
    %v74 = vld [vmem:[#allocation2 + $0xc0] sm:$0xff]
    %v75 = vld [vmem:[#allocation2 + $0xc8] sm:$0xff]
    %v76 = vld [vmem:[#allocation2 + $0xd0] sm:$0xff]
    %v77 = vld [vmem:[#allocation2 + $0xd8] sm:$0xff]
    %v78 = vld [vmem:[#allocation2 + $0xe0] sm:$0xff]
    %v79 = vld [vmem:[#allocation2 + $0xe8] sm:$0xff]
    %v80 = vld [vmem:[#allocation2 + $0xf0] sm:$0xff]
    %v81 = vld [vmem:[#allocation2 + $0xf8] sm:$0xff]
    %v82 = vld [vmem:[#allocation2 + $0x100] sm:$0xff]
    %v83 = vld [vmem:[#allocation2 + $0x108] sm:$0xff]
    %v84 = vld [vmem:[#allocation2 + $0x110] sm:$0xff]
    %v85 = vld [vmem:[#allocation2 + $0x118] sm:$0xff]
    %v86 = vld [vmem:[#allocation2 + $0x120] sm:$0xff]
    %v87 = vld [vmem:[#allocation2 + $0x128] sm:$0xff]
    %v88 = vld [vmem:[#allocation2 + $0x130] sm:$0xff]
    %v89 = vld [vmem:[#allocation2 + $0x138] sm:$0xff]
    %v90 = vld [vmem:[#allocation2 + $0x140] sm:$0xff]
    %v91 = vld [vmem:[#allocation2 + $0x148] sm:$0xff]
    %v92 = vld [vmem:[#allocation2 + $0x150] sm:$0xff]
    %v93 = vld [vmem:[#allocation2 + $0x158] sm:$0xff]
    %v94 = vld [vmem:[#allocation2 + $0x160] sm:$0xff]
    %v95 = vld [vmem:[#allocation2 + $0x168] sm:$0xff]
    %v96 = vld [vmem:[#allocation2 + $0x170] sm:$0xff]
    %v97 = vld [vmem:[#allocation2 + $0x178] sm:$0xff]
    %v98 = vld [vmem:[#allocation2 + $0x180] sm:$0xff]
    %v99 = vld [vmem:[#allocation2 + $0x188] sm:$0xff]
    %v100 = vld [vmem:[#allocation2 + $0x190] sm:$0xff]
    %v101 = vld [vmem:[#allocation2 + $0x198] sm:$0xff]
    %v102 = vld [vmem:[#allocation2 + $0x1a0] sm:$0xff]
    %v103 = vld [vmem:[#allocation2 + $0x1a8] sm:$0xff]
    %v104 = vld [vmem:[#allocation2 + $0x1b0] sm:$0xff]
    %v105 = vld [vmem:[#allocation2 + $0x1b8] sm:$0xff]
    %v106 = vld [vmem:[#allocation2 + $0x1c0] sm:$0xff]
    %v107 = vld [vmem:[#allocation2 + $0x1c8] sm:$0xff]
    %v108 = vld [vmem:[#allocation2 + $0x1d0] sm:$0xff]
    %v109 = vld [vmem:[#allocation2 + $0x1d8] sm:$0xff]
    %v110 = vld [vmem:[#allocation2 + $0x1e0] sm:$0xff]
    %v111 = vld [vmem:[#allocation2 + $0x1e8] sm:$0xff]
    %v112 = vld [vmem:[#allocation2 + $0x1f0] sm:$0xff]
    %v113 = vld [vmem:[#allocation2 + $0x1f8] sm:$0xff]
    %v114 = vld [vmem:[#allocation2 + $0x200] sm:$0xff]
    %v115 = vld [vmem:[#allocation2 + $0x208] sm:$0xff]
    %v116 = vld [vmem:[#allocation2 + $0x210] sm:$0xff]
    %v117 = vld [vmem:[#allocation2 + $0x218] sm:$0xff]
    %v118 = vld [vmem:[#allocation2 + $0x220] sm:$0xff]
    %v119 = vld [vmem:[#allocation2 + $0x228] sm:$0xff]
    %v120 = vld [vmem:[#allocation2 + $0x230] sm:$0xff]
    %v121 = vld [vmem:[#allocation2 + $0x238] sm:$0xff]
    %v122 = vld [vmem:[#allocation2 + $0x240] sm:$0xff]
    %v123 = vld [vmem:[#allocation2 + $0x248] sm:$0xff]
    %v124 = vld [vmem:[#allocation2 + $0x250] sm:$0xff]
    %v125 = vld [vmem:[#allocation2 + $0x258] sm:$0xff]
    %v126 = vld [vmem:[#allocation2 + $0x260] sm:$0xff]
    %v127 = vld [vmem:[#allocation2 + $0x268] sm:$0xff]
    %v128 = vld [vmem:[#allocation2 + $0x270] sm:$0xff]
    %v129 = vld [vmem:[#allocation2 + $0x278] sm:$0xff]
    %v130 = vld [vmem:[#allocation2 + $0x280] sm:$0xff]
    %v131 = vld [vmem:[#allocation2 + $0x288] sm:$0xff]
    %v132 = vld [vmem:[#allocation2 + $0x290] sm:$0xff]
    %v133 = vld [vmem:[#allocation2 + $0x298] sm:$0xff]
    %v134 = vld [vmem:[#allocation2 + $0x2a0] sm:$0xff]
    %v135 = vld [vmem:[#allocation2 + $0x2a8] sm:$0xff]
    %v136 = vld [vmem:[#allocation2 + $0x2b0] sm:$0xff]
    %v137 = vld [vmem:[#allocation2 + $0x2b8] sm:$0xff]
    %v138 = vld [vmem:[#allocation2 + $0x2c0] sm:$0xff]
    %v139 = vld [vmem:[#allocation2 + $0x2c8] sm:$0xff]
    %v140 = vld [vmem:[#allocation2 + $0x2d0] sm:$0xff]
    %v141 = vld [vmem:[#allocation2 + $0x2d8] sm:$0xff]
    %v142 = vld [vmem:[#allocation2 + $0x2e0] sm:$0xff]
    %v143 = vld [vmem:[#allocation2 + $0x2e8] sm:$0xff]
    %v144 = vld [vmem:[#allocation2 + $0x2f0] sm:$0xff]
    %v145 = vld [vmem:[#allocation2 + $0x2f8] sm:$0xff]
    %v146 = vld [vmem:[#allocation2 + $0x300] sm:$0xff]
    %v147 = vld [vmem:[#allocation2 + $0x308] sm:$0xff]
    %v148 = vld [vmem:[#allocation2 + $0x310] sm:$0xff]
    %v149 = vld [vmem:[#allocation2 + $0x318] sm:$0xff]
    %v150 = vld [vmem:[#allocation2 + $0x320] sm:$0xff]
    %v151 = vld [vmem:[#allocation2 + $0x328] sm:$0xff]
    %v152 = vld [vmem:[#allocation2 + $0x330] sm:$0xff]
    %v153 = vld [vmem:[#allocation2 + $0x338] sm:$0xff]
    %v154 = vld [vmem:[#allocation2 + $0x340] sm:$0xff]
    %v155 = vld [vmem:[#allocation2 + $0x348] sm:$0xff]
    %v156 = vld [vmem:[#allocation2 + $0x350] sm:$0xff]
    %v157 = vld [vmem:[#allocation2 + $0x358] sm:$0xff]
    %v158 = vld [vmem:[#allocation2 + $0x360] sm:$0xff]
    %v159 = vld [vmem:[#allocation2 + $0x368] sm:$0xff]
    %v160 = vld [vmem:[#allocation2 + $0x370] sm:$0xff]
    %v161 = vld [vmem:[#allocation2 + $0x378] sm:$0xff]
    %v162 = vld [vmem:[#allocation2 + $0x380] sm:$0xff]
    %v163 = vld [vmem:[#allocation2 + $0x388] sm:$0xff]
    %v164 = vld [vmem:[#allocation2 + $0x390] sm:$0xff]
    %v165 = vld [vmem:[#allocation2 + $0x398] sm:$0xff]
    %v166 = vld [vmem:[#allocation2 + $0x3a0] sm:$0xff]
    %v167 = vld [vmem:[#allocation2 + $0x3a8] sm:$0xff]
    %v168 = vld [vmem:[#allocation2 + $0x3b0] sm:$0xff]
    %v169 = vld [vmem:[#allocation2 + $0x3b8] sm:$0xff]
    %v170 = vld [vmem:[#allocation2 + $0x3c0] sm:$0xff]
    %v171 = vld [vmem:[#allocation2 + $0x3c8] sm:$0xff]
    %v172 = vld [vmem:[#allocation2 + $0x3d0] sm:$0xff]
    %v173 = vld [vmem:[#allocation2 + $0x3d8] sm:$0xff]
    %v174 = vld [vmem:[#allocation2 + $0x3e0] sm:$0xff]
    %v175 = vld [vmem:[#allocation2 + $0x3e8] sm:$0xff]
    %v176 = vld [vmem:[#allocation2 + $0x3f0] sm:$0xff]
    %v177 = vld [vmem:[#allocation2 + $0x3f8] sm:$0xff]
    %v178 = vld [vmem:[#allocation5] sm:$0xf]
    %v179 = vld [vmem:[#allocation5 + $0x4] sm:$0xf]
    %v180 = vld [vmem:[#allocation5 + $0x8] sm:$0xf]
    %v181 = vld [vmem:[#allocation5 + $0xc] sm:$0xf]
    %v182 = vld [vmem:[#allocation5 + $0x10] sm:$0xf]
    %v183 = vld [vmem:[#allocation5 + $0x14] sm:$0xf]
    %v184 = vld [vmem:[#allocation5 + $0x18] sm:$0xf]
    %v185 = vld [vmem:[#allocation5 + $0x1c] sm:$0xf]
    %v186 = vld [vmem:[#allocation5 + $0x20] sm:$0xf]
    %v187 = vld [vmem:[#allocation5 + $0x24] sm:$0xf]
    %v188 = vld [vmem:[#allocation5 + $0x28] sm:$0xf]
    %v189 = vld [vmem:[#allocation5 + $0x2c] sm:$0xf]
    %v190 = vld [vmem:[#allocation5 + $0x30] sm:$0xf]
    %v191 = vld [vmem:[#allocation5 + $0x34] sm:$0xf]
    %v192 = vld [vmem:[#allocation5 + $0x38] sm:$0xf]
    %v193 = vld [vmem:[#allocation5 + $0x3c] sm:$0xf]
    %v194 = vld [vmem:[#allocation5 + $0x40] sm:$0xf]
    %v195 = vld [vmem:[#allocation5 + $0x44] sm:$0xf]
    %v196 = vld [vmem:[#allocation5 + $0x48] sm:$0xf]
    %v197 = vld [vmem:[#allocation5 + $0x4c] sm:$0xf]
    %v198 = vld [vmem:[#allocation5 + $0x50] sm:$0xf]
    %v199 = vld [vmem:[#allocation5 + $0x54] sm:$0xf]
    %v200 = vld [vmem:[#allocation5 + $0x58] sm:$0xf]
    %v201 = vld [vmem:[#allocation5 + $0x5c] sm:$0xf]
    %v202 = vld [vmem:[#allocation5 + $0x60] sm:$0xf]
    %v203 = vld [vmem:[#allocation5 + $0x64] sm:$0xf]
    %v204 = vld [vmem:[#allocation5 + $0x68] sm:$0xf]
    %v205 = vld [vmem:[#allocation5 + $0x6c] sm:$0xf]
    %v206 = vld [vmem:[#allocation5 + $0x70] sm:$0xf]
    %v207 = vld [vmem:[#allocation5 + $0x74] sm:$0xf]
    %v208 = vld [vmem:[#allocation5 + $0x78] sm:$0xf]
    %v209 = vld [vmem:[#allocation5 + $0x7c] sm:$0xf]
    %v210 = vld [vmem:[#allocation5 + $0x80] sm:$0xf]
    %v211 = vld [vmem:[#allocation5 + $0x84] sm:$0xf]
    %v212 = vld [vmem:[#allocation5 + $0x88] sm:$0xf]
    %v213 = vld [vmem:[#allocation5 + $0x8c] sm:$0xf]
    %v214 = vld [vmem:[#allocation5 + $0x90] sm:$0xf]
    %v215 = vld [vmem:[#allocation5 + $0x94] sm:$0xf]
    %v216 = vld [vmem:[#allocation5 + $0x98] sm:$0xf]
    %v217 = vld [vmem:[#allocation5 + $0x9c] sm:$0xf]
    %v218 = vld [vmem:[#allocation5 + $0xa0] sm:$0xf]
    %v219 = vld [vmem:[#allocation5 + $0xa4] sm:$0xf]
    %v220 = vld [vmem:[#allocation5 + $0xa8] sm:$0xf]
    %v221 = vld [vmem:[#allocation5 + $0xac] sm:$0xf]
    %v222 = vld [vmem:[#allocation5 + $0xb0] sm:$0xf]
    %v223 = vld [vmem:[#allocation5 + $0xb4] sm:$0xf]
    %v224 = vld [vmem:[#allocation5 + $0xb8] sm:$0xf]
    %v225 = vld [vmem:[#allocation5 + $0xbc] sm:$0xf]
    %v226 = vld [vmem:[#allocation5 + $0xc0] sm:$0xf]
    %v227 = vld [vmem:[#allocation5 + $0xc4] sm:$0xf]
    %v228 = vld [vmem:[#allocation5 + $0xc8] sm:$0xf]
    %v229 = vld [vmem:[#allocation5 + $0xcc] sm:$0xf]
    %v230 = vld [vmem:[#allocation5 + $0xd0] sm:$0xf]
    %v231 = vld [vmem:[#allocation5 + $0xd4] sm:$0xf]
    %v232 = vld [vmem:[#allocation5 + $0xd8] sm:$0xf]
    %v233 = vld [vmem:[#allocation5 + $0xdc] sm:$0xf]
    %v234 = vld [vmem:[#allocation5 + $0xe0] sm:$0xf]
    %v235 = vld [vmem:[#allocation5 + $0xe4] sm:$0xf]
    %v236 = vld [vmem:[#allocation5 + $0xe8] sm:$0xf]
    %v237 = vld [vmem:[#allocation5 + $0xec] sm:$0xf]
    %v238 = vld [vmem:[#allocation5 + $0xf0] sm:$0xf]
    %v239 = vld [vmem:[#allocation5 + $0xf4] sm:$0xf]
    %v240 = vld [vmem:[#allocation5 + $0xf8] sm:$0xf]
    %v241 = vld [vmem:[#allocation5 + $0xfc] sm:$0xf]
    %v242 = vld [vmem:[#allocation5 + $0x100] sm:$0xf]
    %v243 = vld [vmem:[#allocation5 + $0x104] sm:$0xf]
    %v244 = vld [vmem:[#allocation5 + $0x108] sm:$0xf]
    %v245 = vld [vmem:[#allocation5 + $0x10c] sm:$0xf]
    %v246 = vld [vmem:[#allocation5 + $0x110] sm:$0xf]
    %v247 = vld [vmem:[#allocation5 + $0x114] sm:$0xf]
    %v248 = vld [vmem:[#allocation5 + $0x118] sm:$0xf]
    %v249 = vld [vmem:[#allocation5 + $0x11c] sm:$0xf]
    %v250 = vld [vmem:[#allocation5 + $0x120] sm:$0xf]
    %v251 = vld [vmem:[#allocation5 + $0x124] sm:$0xf]
    %v252 = vld [vmem:[#allocation5 + $0x128] sm:$0xf]
    %v253 = vld [vmem:[#allocation5 + $0x12c] sm:$0xf]
    %v254 = vld [vmem:[#allocation5 + $0x130] sm:$0xf]
    %v255 = vld [vmem:[#allocation5 + $0x134] sm:$0xf]
    %v256 = vld [vmem:[#allocation5 + $0x138] sm:$0xf]
    %v257 = vld [vmem:[#allocation5 + $0x13c] sm:$0xf]
    %v258 = vld [vmem:[#allocation5 + $0x140] sm:$0xf]
    %v259 = vld [vmem:[#allocation5 + $0x144] sm:$0xf]
    %v260 = vld [vmem:[#allocation5 + $0x148] sm:$0xf]
    %v261 = vld [vmem:[#allocation5 + $0x14c] sm:$0xf]
    %v262 = vld [vmem:[#allocation5 + $0x150] sm:$0xf]
    %v263 = vld [vmem:[#allocation5 + $0x154] sm:$0xf]
    %v264 = vld [vmem:[#allocation5 + $0x158] sm:$0xf]
    %v265 = vld [vmem:[#allocation5 + $0x15c] sm:$0xf]
    %v266 = vld [vmem:[#allocation5 + $0x160] sm:$0xf]
    %v267 = vld [vmem:[#allocation5 + $0x164] sm:$0xf]
    %v268 = vld [vmem:[#allocation5 + $0x168] sm:$0xf]
    %v269 = vld [vmem:[#allocation5 + $0x16c] sm:$0xf]
    %v270 = vld [vmem:[#allocation5 + $0x170] sm:$0xf]
    %v271 = vld [vmem:[#allocation5 + $0x174] sm:$0xf]
    %v272 = vld [vmem:[#allocation5 + $0x178] sm:$0xf]
    %v273 = vld [vmem:[#allocation5 + $0x17c] sm:$0xf]
    %v274 = vld [vmem:[#allocation5 + $0x180] sm:$0xf]
    %v275 = vld [vmem:[#allocation5 + $0x184] sm:$0xf]
    %v276 = vld [vmem:[#allocation5 + $0x188] sm:$0xf]
    %v277 = vld [vmem:[#allocation5 + $0x18c] sm:$0xf]
    %v278 = vld [vmem:[#allocation5 + $0x190] sm:$0xf]
    %v279 = vld [vmem:[#allocation5 + $0x194] sm:$0xf]
    %v280 = vld [vmem:[#allocation5 + $0x198] sm:$0xf]
    %v281 = vld [vmem:[#allocation5 + $0x19c] sm:$0xf]
    %v282 = vld [vmem:[#allocation5 + $0x1a0] sm:$0xf]
    %v283 = vld [vmem:[#allocation5 + $0x1a4] sm:$0xf]
    %v284 = vld [vmem:[#allocation5 + $0x1a8] sm:$0xf]
    %v285 = vld [vmem:[#allocation5 + $0x1ac] sm:$0xf]
    %v286 = vld [vmem:[#allocation5 + $0x1b0] sm:$0xf]
    %v287 = vld [vmem:[#allocation5 + $0x1b4] sm:$0xf]
    %v288 = vld [vmem:[#allocation5 + $0x1b8] sm:$0xf]
    %v289 = vld [vmem:[#allocation5 + $0x1bc] sm:$0xf]
    %v290 = vld [vmem:[#allocation5 + $0x1c0] sm:$0xf]
    %v291 = vld [vmem:[#allocation5 + $0x1c4] sm:$0xf]
    %v292 = vld [vmem:[#allocation5 + $0x1c8] sm:$0xf]
    %v293 = vld [vmem:[#allocation5 + $0x1cc] sm:$0xf]
    %v294 = vld [vmem:[#allocation5 + $0x1d0] sm:$0xf]
    %v295 = vld [vmem:[#allocation5 + $0x1d4] sm:$0xf]
    %v296 = vld [vmem:[#allocation5 + $0x1d8] sm:$0xf]
    %v297 = vld [vmem:[#allocation5 + $0x1dc] sm:$0xf]
    %v298 = vld [vmem:[#allocation5 + $0x1e0] sm:$0xf]
    %v299 = vld [vmem:[#allocation5 + $0x1e4] sm:$0xf]
    %v300 = vld [vmem:[#allocation5 + $0x1e8] sm:$0xf]
    %v301 = vld [vmem:[#allocation5 + $0x1ec] sm:$0xf]
    %v302 = vld [vmem:[#allocation5 + $0x1f0] sm:$0xf]
    %v303 = vld [vmem:[#allocation5 + $0x1f4] sm:$0xf]
    %v304 = vld [vmem:[#allocation5 + $0x1f8] sm:$0xf]
    %v305 = vld [vmem:[#allocation5 + $0x1fc] sm:$0xf]
    %v306 = vld [vmem:[#allocation5 + $0x200] sm:$0xf]
    %v307 = vld [vmem:[#allocation5 + $0x204] sm:$0xf]
    %v308 = vld [vmem:[#allocation5 + $0x208] sm:$0xf]
    %v309 = vld [vmem:[#allocation5 + $0x20c] sm:$0xf]
    %v310 = vld [vmem:[#allocation5 + $0x210] sm:$0xf]
    %v311 = vld [vmem:[#allocation5 + $0x214] sm:$0xf]
    %v312 = vld [vmem:[#allocation5 + $0x218] sm:$0xf]
    %v313 = vld [vmem:[#allocation5 + $0x21c] sm:$0xf]
    %v314 = vld [vmem:[#allocation5 + $0x220] sm:$0xf]
    %v315 = vld [vmem:[#allocation5 + $0x224] sm:$0xf]
    %v316 = vld [vmem:[#allocation5 + $0x228] sm:$0xf]
    %v317 = vld [vmem:[#allocation5 + $0x22c] sm:$0xf]
    %v318 = vld [vmem:[#allocation5 + $0x230] sm:$0xf]
    %v319 = vld [vmem:[#allocation5 + $0x234] sm:$0xf]
    %v320 = vld [vmem:[#allocation5 + $0x238] sm:$0xf]
    %v321 = vld [vmem:[#allocation5 + $0x23c] sm:$0xf]
    %v322 = vld [vmem:[#allocation5 + $0x240] sm:$0xf]
    %v323 = vld [vmem:[#allocation5 + $0x244] sm:$0xf]
    %v324 = vld [vmem:[#allocation5 + $0x248] sm:$0xf]
    %v325 = vld [vmem:[#allocation5 + $0x24c] sm:$0xf]
    %v326 = vld [vmem:[#allocation5 + $0x250] sm:$0xf]
    %v327 = vld [vmem:[#allocation5 + $0x254] sm:$0xf]
    %v328 = vld [vmem:[#allocation5 + $0x258] sm:$0xf]
    %v329 = vld [vmem:[#allocation5 + $0x25c] sm:$0xf]
    %v330 = vld [vmem:[#allocation5 + $0x260] sm:$0xf]
    %v331 = vld [vmem:[#allocation5 + $0x264] sm:$0xf]
    %v332 = vld [vmem:[#allocation5 + $0x268] sm:$0xf]
    %v333 = vld [vmem:[#allocation5 + $0x26c] sm:$0xf]
    %v334 = vld [vmem:[#allocation5 + $0x270] sm:$0xf]
    %v335 = vld [vmem:[#allocation5 + $0x274] sm:$0xf]
    %v336 = vld [vmem:[#allocation5 + $0x278] sm:$0xf]
    %v337 = vld [vmem:[#allocation5 + $0x27c] sm:$0xf]
    %v338 = vld [vmem:[#allocation5 + $0x280] sm:$0xf]
    %v339 = vld [vmem:[#allocation5 + $0x284] sm:$0xf]
    %v340 = vld [vmem:[#allocation5 + $0x288] sm:$0xf]
    %v341 = vld [vmem:[#allocation5 + $0x28c] sm:$0xf]
    %v342 = vld [vmem:[#allocation5 + $0x290] sm:$0xf]
    %v343 = vld [vmem:[#allocation5 + $0x294] sm:$0xf]
    %v344 = vld [vmem:[#allocation5 + $0x298] sm:$0xf]
    %v345 = vld [vmem:[#allocation5 + $0x29c] sm:$0xf]
    %v346 = vld [vmem:[#allocation5 + $0x2a0] sm:$0xf]
    %v347 = vld [vmem:[#allocation5 + $0x2a4] sm:$0xf]
    %v348 = vld [vmem:[#allocation5 + $0x2a8] sm:$0xf]
    %v349 = vld [vmem:[#allocation5 + $0x2ac] sm:$0xf]
    %v350 = vld [vmem:[#allocation5 + $0x2b0] sm:$0xf]
    %v351 = vld [vmem:[#allocation5 + $0x2b4] sm:$0xf]
    %v352 = vld [vmem:[#allocation5 + $0x2b8] sm:$0xf]
    %v353 = vld [vmem:[#allocation5 + $0x2bc] sm:$0xf]
    %v354 = vld [vmem:[#allocation5 + $0x2c0] sm:$0xf]
    %v355 = vld [vmem:[#allocation5 + $0x2c4] sm:$0xf]
    %v356 = vld [vmem:[#allocation5 + $0x2c8] sm:$0xf]
    %v357 = vld [vmem:[#allocation5 + $0x2cc] sm:$0xf]
    %v358 = vld [vmem:[#allocation5 + $0x2d0] sm:$0xf]
    %v359 = vld [vmem:[#allocation5 + $0x2d4] sm:$0xf]
    %v360 = vld [vmem:[#allocation5 + $0x2d8] sm:$0xf]
    %v361 = vld [vmem:[#allocation5 + $0x2dc] sm:$0xf]
    %v362 = vld [vmem:[#allocation5 + $0x2e0] sm:$0xf]
    %v363 = vld [vmem:[#allocation5 + $0x2e4] sm:$0xf]
    %v364 = vld [vmem:[#allocation5 + $0x2e8] sm:$0xf]
    %v365 = vld [vmem:[#allocation5 + $0x2ec] sm:$0xf]
    %v366 = vld [vmem:[#allocation5 + $0x2f0] sm:$0xf]
    %v367 = vld [vmem:[#allocation5 + $0x2f4] sm:$0xf]
    %v368 = vld [vmem:[#allocation5 + $0x2f8] sm:$0xf]
    %v369 = vld [vmem:[#allocation5 + $0x2fc] sm:$0xf]
    %v370 = vld [vmem:[#allocation5 + $0x300] sm:$0xf]
    %v371 = vld [vmem:[#allocation5 + $0x304] sm:$0xf]
    %v372 = vld [vmem:[#allocation5 + $0x308] sm:$0xf]
    %v373 = vld [vmem:[#allocation5 + $0x30c] sm:$0xf]
    %v374 = vld [vmem:[#allocation5 + $0x310] sm:$0xf]
    %v375 = vld [vmem:[#allocation5 + $0x314] sm:$0xf]
    %v376 = vld [vmem:[#allocation5 + $0x318] sm:$0xf]
    %v377 = vld [vmem:[#allocation5 + $0x31c] sm:$0xf]
    %v378 = vld [vmem:[#allocation5 + $0x320] sm:$0xf]
    %v379 = vld [vmem:[#allocation5 + $0x324] sm:$0xf]
    %v380 = vld [vmem:[#allocation5 + $0x328] sm:$0xf]
    %v381 = vld [vmem:[#allocation5 + $0x32c] sm:$0xf]
    %v382 = vld [vmem:[#allocation5 + $0x330] sm:$0xf]
    %v383 = vld [vmem:[#allocation5 + $0x334] sm:$0xf]
    %v384 = vld [vmem:[#allocation5 + $0x338] sm:$0xf]
    %v385 = vld [vmem:[#allocation5 + $0x33c] sm:$0xf]
    %v386 = vld [vmem:[#allocation5 + $0x340] sm:$0xf]
    %v387 = vld [vmem:[#allocation5 + $0x344] sm:$0xf]
    %v388 = vld [vmem:[#allocation5 + $0x348] sm:$0xf]
    %v389 = vld [vmem:[#allocation5 + $0x34c] sm:$0xf]
    %v390 = vld [vmem:[#allocation5 + $0x350] sm:$0xf]
    %v391 = vld [vmem:[#allocation5 + $0x354] sm:$0xf]
    %v392 = vld [vmem:[#allocation5 + $0x358] sm:$0xf]
    %v393 = vld [vmem:[#allocation5 + $0x35c] sm:$0xf]
    %v394 = vld [vmem:[#allocation5 + $0x360] sm:$0xf]
    %v395 = vld [vmem:[#allocation5 + $0x364] sm:$0xf]
    %v396 = vld [vmem:[#allocation5 + $0x368] sm:$0xf]
    %v397 = vld [vmem:[#allocation5 + $0x36c] sm:$0xf]
    %v398 = vld [vmem:[#allocation5 + $0x370] sm:$0xf]
    %v399 = vld [vmem:[#allocation5 + $0x374] sm:$0xf]
    %v400 = vld [vmem:[#allocation5 + $0x378] sm:$0xf]
    %v401 = vld [vmem:[#allocation5 + $0x37c] sm:$0xf]
    %v402 = vld [vmem:[#allocation5 + $0x380] sm:$0xf]
    %v403 = vld [vmem:[#allocation5 + $0x384] sm:$0xf]
    %v404 = vld [vmem:[#allocation5 + $0x388] sm:$0xf]
    %v405 = vld [vmem:[#allocation5 + $0x38c] sm:$0xf]
    %v406 = vld [vmem:[#allocation5 + $0x390] sm:$0xf]
    %v407 = vld [vmem:[#allocation5 + $0x394] sm:$0xf]
    %v408 = vld [vmem:[#allocation5 + $0x398] sm:$0xf]
    %v409 = vld [vmem:[#allocation5 + $0x39c] sm:$0xf]
    %v410 = vld [vmem:[#allocation5 + $0x3a0] sm:$0xf]
    %v411 = vld [vmem:[#allocation5 + $0x3a4] sm:$0xf]
    %v412 = vld [vmem:[#allocation5 + $0x3a8] sm:$0xf]
    %v413 = vld [vmem:[#allocation5 + $0x3ac] sm:$0xf]
    %v414 = vld [vmem:[#allocation5 + $0x3b0] sm:$0xf]
    %v415 = vld [vmem:[#allocation5 + $0x3b4] sm:$0xf]
    %v416 = vld [vmem:[#allocation5 + $0x3b8] sm:$0xf]
    %v417 = vld [vmem:[#allocation5 + $0x3bc] sm:$0xf]
    %v418 = vld [vmem:[#allocation5 + $0x3c0] sm:$0xf]
    %v419 = vld [vmem:[#allocation5 + $0x3c4] sm:$0xf]
    %v420 = vld [vmem:[#allocation5 + $0x3c8] sm:$0xf]
    %v421 = vld [vmem:[#allocation5 + $0x3cc] sm:$0xf]
    %v422 = vld [vmem:[#allocation5 + $0x3d0] sm:$0xf]
    %v423 = vld [vmem:[#allocation5 + $0x3d4] sm:$0xf]
    %v424 = vld [vmem:[#allocation5 + $0x3d8] sm:$0xf]
    %v425 = vld [vmem:[#allocation5 + $0x3dc] sm:$0xf]
    %v426 = vld [vmem:[#allocation5 + $0x3e0] sm:$0xf]
    %v427 = vld [vmem:[#allocation5 + $0x3e4] sm:$0xf]
    %v428 = vld [vmem:[#allocation5 + $0x3e8] sm:$0xf]
    %v429 = vld [vmem:[#allocation5 + $0x3ec] sm:$0xf]
    %v430 = vld [vmem:[#allocation5 + $0x3f0] sm:$0xf]
    %v431 = vld [vmem:[#allocation5 + $0x3f4] sm:$0xf]
    %v432 = vld [vmem:[#allocation5 + $0x3f8] sm:$0xf]
    %v433 = vld [vmem:[#allocation5 + $0x3fc] sm:$0xf]
    %v434 = vld [vmem:[%s2] sm:$0x1]
    %v436 = vlaneseq
    %v437 = vshrl.u32 %v436, 7
    %v438 = vsub.s32 0, %v437
    %v439 = vrot.slane %v434, %v438
    %v569 = vunpack.c.l.b16 %v50
    %v570 = vunpack.c.h.b16 %v50
    %v571 = vunpack.c.l.b16 %v51
    %v572 = vunpack.c.h.b16 %v51
    %v573 = vunpack.c.l.b16 %v52
    %v574 = vunpack.c.h.b16 %v52
    %v575 = vunpack.c.l.b16 %v53
    %v576 = vunpack.c.h.b16 %v53
    %v577 = vunpack.c.l.b16 %v54
    %v578 = vunpack.c.h.b16 %v54
    %v579 = vunpack.c.l.b16 %v55
    %v580 = vunpack.c.h.b16 %v55
    %v581 = vunpack.c.l.b16 %v56
    %v582 = vunpack.c.h.b16 %v56
    %v583 = vunpack.c.l.b16 %v57
    %v584 = vunpack.c.h.b16 %v57
    %v585 = vunpack.c.l.b16 %v58
    %v586 = vunpack.c.h.b16 %v58
    %v587 = vunpack.c.l.b16 %v59
    %v588 = vunpack.c.h.b16 %v59
    %v589 = vunpack.c.l.b16 %v60
    %v590 = vunpack.c.h.b16 %v60
    %v591 = vunpack.c.l.b16 %v61
    %v592 = vunpack.c.h.b16 %v61
    %v593 = vunpack.c.l.b16 %v62
    %v594 = vunpack.c.h.b16 %v62
    %v595 = vunpack.c.l.b16 %v63
    %v596 = vunpack.c.h.b16 %v63
    %v597 = vunpack.c.l.b16 %v64
    %v598 = vunpack.c.h.b16 %v64
    %v599 = vunpack.c.l.b16 %v65
    %v600 = vunpack.c.h.b16 %v65
    %v601 = vunpack.c.l.b16 %v66
    %v602 = vunpack.c.h.b16 %v66
    %v603 = vunpack.c.l.b16 %v67
    %v604 = vunpack.c.h.b16 %v67
    %v605 = vunpack.c.l.b16 %v68
    %v606 = vunpack.c.h.b16 %v68
    %v607 = vunpack.c.l.b16 %v69
    %v608 = vunpack.c.h.b16 %v69
    %v609 = vunpack.c.l.b16 %v70
    %v610 = vunpack.c.h.b16 %v70
    %v611 = vunpack.c.l.b16 %v71
    %v612 = vunpack.c.h.b16 %v71
    %v613 = vunpack.c.l.b16 %v72
    %v614 = vunpack.c.h.b16 %v72
    %v615 = vunpack.c.l.b16 %v73
    %v616 = vunpack.c.h.b16 %v73
    %v617 = vunpack.c.l.b16 %v74
    %v618 = vunpack.c.h.b16 %v74
    %v619 = vunpack.c.l.b16 %v75
    %v620 = vunpack.c.h.b16 %v75
    %v621 = vunpack.c.l.b16 %v76
    %v622 = vunpack.c.h.b16 %v76
    %v623 = vunpack.c.l.b16 %v77
    %v624 = vunpack.c.h.b16 %v77
    %v625 = vunpack.c.l.b16 %v78
    %v626 = vunpack.c.h.b16 %v78
    %v627 = vunpack.c.l.b16 %v79
    %v628 = vunpack.c.h.b16 %v79
    %v629 = vunpack.c.l.b16 %v80
    %v630 = vunpack.c.h.b16 %v80
    %v631 = vunpack.c.l.b16 %v81
    %v632 = vunpack.c.h.b16 %v81
    %v633 = vunpack.c.l.b16 %v82
    %v634 = vunpack.c.h.b16 %v82
    %v635 = vunpack.c.l.b16 %v83
    %v636 = vunpack.c.h.b16 %v83
    %v637 = vunpack.c.l.b16 %v84
    %v638 = vunpack.c.h.b16 %v84
    %v639 = vunpack.c.l.b16 %v85
    %v640 = vunpack.c.h.b16 %v85
    %v641 = vunpack.c.l.b16 %v86
    %v642 = vunpack.c.h.b16 %v86
    %v643 = vunpack.c.l.b16 %v87
    %v644 = vunpack.c.h.b16 %v87
    %v645 = vunpack.c.l.b16 %v88
    %v646 = vunpack.c.h.b16 %v88
    %v647 = vunpack.c.l.b16 %v89
    %v648 = vunpack.c.h.b16 %v89
    %v649 = vunpack.c.l.b16 %v90
    %v650 = vunpack.c.h.b16 %v90
    %v651 = vunpack.c.l.b16 %v91
    %v652 = vunpack.c.h.b16 %v91
    %v653 = vunpack.c.l.b16 %v92
    %v654 = vunpack.c.h.b16 %v92
    %v655 = vunpack.c.l.b16 %v93
    %v656 = vunpack.c.h.b16 %v93
    %v657 = vunpack.c.l.b16 %v94
    %v658 = vunpack.c.h.b16 %v94
    %v659 = vunpack.c.l.b16 %v95
    %v660 = vunpack.c.h.b16 %v95
    %v661 = vunpack.c.l.b16 %v96
    %v662 = vunpack.c.h.b16 %v96
    %v663 = vunpack.c.l.b16 %v97
    %v664 = vunpack.c.h.b16 %v97
    %v665 = vunpack.c.l.b16 %v98
    %v666 = vunpack.c.h.b16 %v98
    %v667 = vunpack.c.l.b16 %v99
    %v668 = vunpack.c.h.b16 %v99
    %v669 = vunpack.c.l.b16 %v100
    %v670 = vunpack.c.h.b16 %v100
    %v671 = vunpack.c.l.b16 %v101
    %v672 = vunpack.c.h.b16 %v101
    %v673 = vunpack.c.l.b16 %v102
    %v674 = vunpack.c.h.b16 %v102
    %v675 = vunpack.c.l.b16 %v103
    %v676 = vunpack.c.h.b16 %v103
    %v677 = vunpack.c.l.b16 %v104
    %v678 = vunpack.c.h.b16 %v104
    %v679 = vunpack.c.l.b16 %v105
    %v680 = vunpack.c.h.b16 %v105
    %v681 = vunpack.c.l.b16 %v106
    %v682 = vunpack.c.h.b16 %v106
    %v683 = vunpack.c.l.b16 %v107
    %v684 = vunpack.c.h.b16 %v107
    %v685 = vunpack.c.l.b16 %v108
    %v686 = vunpack.c.h.b16 %v108
    %v687 = vunpack.c.l.b16 %v109
    %v688 = vunpack.c.h.b16 %v109
    %v689 = vunpack.c.l.b16 %v110
    %v690 = vunpack.c.h.b16 %v110
    %v691 = vunpack.c.l.b16 %v111
    %v692 = vunpack.c.h.b16 %v111
    %v693 = vunpack.c.l.b16 %v112
    %v694 = vunpack.c.h.b16 %v112
    %v695 = vunpack.c.l.b16 %v113
    %v696 = vunpack.c.h.b16 %v113
    %v697 = vunpack.c.l.b16 %v114
    %v698 = vunpack.c.h.b16 %v114
    %v699 = vunpack.c.l.b16 %v115
    %v700 = vunpack.c.h.b16 %v115
    %v701 = vunpack.c.l.b16 %v116
    %v702 = vunpack.c.h.b16 %v116
    %v703 = vunpack.c.l.b16 %v117
    %v704 = vunpack.c.h.b16 %v117
    %v705 = vunpack.c.l.b16 %v118
    %v706 = vunpack.c.h.b16 %v118
    %v707 = vunpack.c.l.b16 %v119
    %v708 = vunpack.c.h.b16 %v119
    %v709 = vunpack.c.l.b16 %v120
    %v710 = vunpack.c.h.b16 %v120
    %v711 = vunpack.c.l.b16 %v121
    %v712 = vunpack.c.h.b16 %v121
    %v713 = vunpack.c.l.b16 %v122
    %v714 = vunpack.c.h.b16 %v122
    %v715 = vunpack.c.l.b16 %v123
    %v716 = vunpack.c.h.b16 %v123
    %v717 = vunpack.c.l.b16 %v124
    %v718 = vunpack.c.h.b16 %v124
    %v719 = vunpack.c.l.b16 %v125
    %v720 = vunpack.c.h.b16 %v125
    %v721 = vunpack.c.l.b16 %v126
    %v722 = vunpack.c.h.b16 %v126
    %v723 = vunpack.c.l.b16 %v127
    %v724 = vunpack.c.h.b16 %v127
    %v725 = vunpack.c.l.b16 %v128
    %v726 = vunpack.c.h.b16 %v128
    %v727 = vunpack.c.l.b16 %v129
    %v728 = vunpack.c.h.b16 %v129
    %v729 = vunpack.c.l.b16 %v130
    %v730 = vunpack.c.h.b16 %v130
    %v731 = vunpack.c.l.b16 %v131
    %v732 = vunpack.c.h.b16 %v131
    %v733 = vunpack.c.l.b16 %v132
    %v734 = vunpack.c.h.b16 %v132
    %v735 = vunpack.c.l.b16 %v133
    %v736 = vunpack.c.h.b16 %v133
    %v737 = vunpack.c.l.b16 %v134
    %v738 = vunpack.c.h.b16 %v134
    %v739 = vunpack.c.l.b16 %v135
    %v740 = vunpack.c.h.b16 %v135
    %v741 = vunpack.c.l.b16 %v136
    %v742 = vunpack.c.h.b16 %v136
    %v743 = vunpack.c.l.b16 %v137
    %v744 = vunpack.c.h.b16 %v137
    %v745 = vunpack.c.l.b16 %v138
    %v746 = vunpack.c.h.b16 %v138
    %v747 = vunpack.c.l.b16 %v139
    %v748 = vunpack.c.h.b16 %v139
    %v749 = vunpack.c.l.b16 %v140
    %v750 = vunpack.c.h.b16 %v140
    %v751 = vunpack.c.l.b16 %v141
    %v752 = vunpack.c.h.b16 %v141
    %v753 = vunpack.c.l.b16 %v142
    %v754 = vunpack.c.h.b16 %v142
    %v755 = vunpack.c.l.b16 %v143
    %v756 = vunpack.c.h.b16 %v143
    %v757 = vunpack.c.l.b16 %v144
    %v758 = vunpack.c.h.b16 %v144
    %v759 = vunpack.c.l.b16 %v145
    %v760 = vunpack.c.h.b16 %v145
    %v761 = vunpack.c.l.b16 %v146
    %v762 = vunpack.c.h.b16 %v146
    %v763 = vunpack.c.l.b16 %v147
    %v764 = vunpack.c.h.b16 %v147
    %v765 = vunpack.c.l.b16 %v148
    %v766 = vunpack.c.h.b16 %v148
    %v767 = vunpack.c.l.b16 %v149
    %v768 = vunpack.c.h.b16 %v149
    %v769 = vunpack.c.l.b16 %v150
    %v770 = vunpack.c.h.b16 %v150
    %v771 = vunpack.c.l.b16 %v151
    %v772 = vunpack.c.h.b16 %v151
    %v773 = vunpack.c.l.b16 %v152
    %v774 = vunpack.c.h.b16 %v152
    %v775 = vunpack.c.l.b16 %v153
    %v776 = vunpack.c.h.b16 %v153
    %v777 = vunpack.c.l.b16 %v154
    %v778 = vunpack.c.h.b16 %v154
    %v779 = vunpack.c.l.b16 %v155
    %v780 = vunpack.c.h.b16 %v155
    %v781 = vunpack.c.l.b16 %v156
    %v782 = vunpack.c.h.b16 %v156
    %v783 = vunpack.c.l.b16 %v157
    %v784 = vunpack.c.h.b16 %v157
    %v785 = vunpack.c.l.b16 %v158
    %v786 = vunpack.c.h.b16 %v158
    %v787 = vunpack.c.l.b16 %v159
    %v788 = vunpack.c.h.b16 %v159
    %v789 = vunpack.c.l.b16 %v160
    %v790 = vunpack.c.h.b16 %v160
    %v791 = vunpack.c.l.b16 %v161
    %v792 = vunpack.c.h.b16 %v161
    %v793 = vunpack.c.l.b16 %v162
    %v794 = vunpack.c.h.b16 %v162
    %v795 = vunpack.c.l.b16 %v163
    %v796 = vunpack.c.h.b16 %v163
    %v797 = vunpack.c.l.b16 %v164
    %v798 = vunpack.c.h.b16 %v164
    %v799 = vunpack.c.l.b16 %v165
    %v800 = vunpack.c.h.b16 %v165
    %v801 = vunpack.c.l.b16 %v166
    %v802 = vunpack.c.h.b16 %v166
    %v803 = vunpack.c.l.b16 %v167
    %v804 = vunpack.c.h.b16 %v167
    %v805 = vunpack.c.l.b16 %v168
    %v806 = vunpack.c.h.b16 %v168
    %v807 = vunpack.c.l.b16 %v169
    %v808 = vunpack.c.h.b16 %v169
    %v809 = vunpack.c.l.b16 %v170
    %v810 = vunpack.c.h.b16 %v170
    %v811 = vunpack.c.l.b16 %v171
    %v812 = vunpack.c.h.b16 %v171
    %v813 = vunpack.c.l.b16 %v172
    %v814 = vunpack.c.h.b16 %v172
    %v815 = vunpack.c.l.b16 %v173
    %v816 = vunpack.c.h.b16 %v173
    %v817 = vunpack.c.l.b16 %v174
    %v818 = vunpack.c.h.b16 %v174
    %v819 = vunpack.c.l.b16 %v175
    %v820 = vunpack.c.h.b16 %v175
    %v821 = vunpack.c.l.b16 %v176
    %v822 = vunpack.c.h.b16 %v176
    %v823 = vunpack.c.l.b16 %v177
    %v824 = vunpack.c.h.b16 %v177
    %v825 = vpack.c.b16 %v585, %v569
    %v826 = vpack.c.b16 %v586, %v570
    %v827 = vpack.c.b16 %v587, %v571
    %v828 = vpack.c.b16 %v588, %v572
    %v829 = vpack.c.b16 %v589, %v573
    %v830 = vpack.c.b16 %v590, %v574
    %v831 = vpack.c.b16 %v591, %v575
    %v832 = vpack.c.b16 %v592, %v576
    %v833 = vpack.c.b16 %v593, %v577
    %v834 = vpack.c.b16 %v594, %v578
    %v835 = vpack.c.b16 %v595, %v579
    %v836 = vpack.c.b16 %v596, %v580
    %v837 = vpack.c.b16 %v597, %v581
    %v838 = vpack.c.b16 %v598, %v582
    %v839 = vpack.c.b16 %v599, %v583
    %v840 = vpack.c.b16 %v600, %v584
    %v841 = vpack.c.b16 %v617, %v601
    %v842 = vpack.c.b16 %v618, %v602
    %v843 = vpack.c.b16 %v619, %v603
    %v844 = vpack.c.b16 %v620, %v604
    %v845 = vpack.c.b16 %v621, %v605
    %v846 = vpack.c.b16 %v622, %v606
    %v847 = vpack.c.b16 %v623, %v607
    %v848 = vpack.c.b16 %v624, %v608
    %v849 = vpack.c.b16 %v625, %v609
    %v850 = vpack.c.b16 %v626, %v610
    %v851 = vpack.c.b16 %v627, %v611
    %v852 = vpack.c.b16 %v628, %v612
    %v853 = vpack.c.b16 %v629, %v613
    %v854 = vpack.c.b16 %v630, %v614
    %v855 = vpack.c.b16 %v631, %v615
    %v856 = vpack.c.b16 %v632, %v616
    %v857 = vpack.c.b16 %v649, %v633
    %v858 = vpack.c.b16 %v650, %v634
    %v859 = vpack.c.b16 %v651, %v635
    %v860 = vpack.c.b16 %v652, %v636
    %v861 = vpack.c.b16 %v653, %v637
    %v862 = vpack.c.b16 %v654, %v638
    %v863 = vpack.c.b16 %v655, %v639
    %v864 = vpack.c.b16 %v656, %v640
    %v865 = vpack.c.b16 %v657, %v641
    %v866 = vpack.c.b16 %v658, %v642
    %v867 = vpack.c.b16 %v659, %v643
    %v868 = vpack.c.b16 %v660, %v644
    %v869 = vpack.c.b16 %v661, %v645
    %v870 = vpack.c.b16 %v662, %v646
    %v871 = vpack.c.b16 %v663, %v647
    %v872 = vpack.c.b16 %v664, %v648
    %v873 = vpack.c.b16 %v681, %v665
    %v874 = vpack.c.b16 %v682, %v666
    %v875 = vpack.c.b16 %v683, %v667
    %v876 = vpack.c.b16 %v684, %v668
    %v877 = vpack.c.b16 %v685, %v669
    %v878 = vpack.c.b16 %v686, %v670
    %v879 = vpack.c.b16 %v687, %v671
    %v880 = vpack.c.b16 %v688, %v672
    %v881 = vpack.c.b16 %v689, %v673
    %v882 = vpack.c.b16 %v690, %v674
    %v883 = vpack.c.b16 %v691, %v675
    %v884 = vpack.c.b16 %v692, %v676
    %v885 = vpack.c.b16 %v693, %v677
    %v886 = vpack.c.b16 %v694, %v678
    %v887 = vpack.c.b16 %v695, %v679
    %v888 = vpack.c.b16 %v696, %v680
    %v889 = vpack.c.b16 %v713, %v697
    %v890 = vpack.c.b16 %v714, %v698
    %v891 = vpack.c.b16 %v715, %v699
    %v892 = vpack.c.b16 %v716, %v700
    %v893 = vpack.c.b16 %v717, %v701
    %v894 = vpack.c.b16 %v718, %v702
    %v895 = vpack.c.b16 %v719, %v703
    %v896 = vpack.c.b16 %v720, %v704
    %v897 = vpack.c.b16 %v721, %v705
    %v898 = vpack.c.b16 %v722, %v706
    %v899 = vpack.c.b16 %v723, %v707
    %v900 = vpack.c.b16 %v724, %v708
    %v901 = vpack.c.b16 %v725, %v709
    %v902 = vpack.c.b16 %v726, %v710
    %v903 = vpack.c.b16 %v727, %v711
    %v904 = vpack.c.b16 %v728, %v712
    %v905 = vpack.c.b16 %v745, %v729
    %v906 = vpack.c.b16 %v746, %v730
    %v907 = vpack.c.b16 %v747, %v731
    %v908 = vpack.c.b16 %v748, %v732
    %v909 = vpack.c.b16 %v749, %v733
    %v910 = vpack.c.b16 %v750, %v734
    %v911 = vpack.c.b16 %v751, %v735
    %v912 = vpack.c.b16 %v752, %v736
    %v913 = vpack.c.b16 %v753, %v737
    %v914 = vpack.c.b16 %v754, %v738
    %v915 = vpack.c.b16 %v755, %v739
    %v916 = vpack.c.b16 %v756, %v740
    %v917 = vpack.c.b16 %v757, %v741
    %v918 = vpack.c.b16 %v758, %v742
    %v919 = vpack.c.b16 %v759, %v743
    %v920 = vpack.c.b16 %v760, %v744
    %v921 = vpack.c.b16 %v777, %v761
    %v922 = vpack.c.b16 %v778, %v762
    %v923 = vpack.c.b16 %v779, %v763
    %v924 = vpack.c.b16 %v780, %v764
    %v925 = vpack.c.b16 %v781, %v765
    %v926 = vpack.c.b16 %v782, %v766
    %v927 = vpack.c.b16 %v783, %v767
    %v928 = vpack.c.b16 %v784, %v768
    %v929 = vpack.c.b16 %v785, %v769
    %v930 = vpack.c.b16 %v786, %v770
    %v931 = vpack.c.b16 %v787, %v771
    %v932 = vpack.c.b16 %v788, %v772
    %v933 = vpack.c.b16 %v789, %v773
    %v934 = vpack.c.b16 %v790, %v774
    %v935 = vpack.c.b16 %v791, %v775
    %v936 = vpack.c.b16 %v792, %v776
    %v937 = vpack.c.b16 %v809, %v793
    %v938 = vpack.c.b16 %v810, %v794
    %v939 = vpack.c.b16 %v811, %v795
    %v940 = vpack.c.b16 %v812, %v796
    %v941 = vpack.c.b16 %v813, %v797
    %v942 = vpack.c.b16 %v814, %v798
    %v943 = vpack.c.b16 %v815, %v799
    %v944 = vpack.c.b16 %v816, %v800
    %v945 = vpack.c.b16 %v817, %v801
    %v946 = vpack.c.b16 %v818, %v802
    %v947 = vpack.c.b16 %v819, %v803
    %v948 = vpack.c.b16 %v820, %v804
    %v949 = vpack.c.b16 %v821, %v805
    %v950 = vpack.c.b16 %v822, %v806
    %v951 = vpack.c.b16 %v823, %v807
    %v952 = vpack.c.b16 %v824, %v808
    %v1337 = vunpack.c.l.b16 %v178
    %v1338 = vunpack.c.l.b16 %v179
    %v1339 = vunpack.c.l.b16 %v180
    %v1340 = vunpack.c.l.b16 %v181
    %v1341 = vunpack.c.l.b16 %v182
    %v1342 = vunpack.c.l.b16 %v183
    %v1343 = vunpack.c.l.b16 %v184
    %v1344 = vunpack.c.l.b16 %v185
    %v1345 = vunpack.c.l.b16 %v186
    %v1346 = vunpack.c.l.b16 %v187
    %v1347 = vunpack.c.l.b16 %v188
    %v1348 = vunpack.c.l.b16 %v189
    %v1349 = vunpack.c.l.b16 %v190
    %v1350 = vunpack.c.l.b16 %v191
    %v1351 = vunpack.c.l.b16 %v192
    %v1352 = vunpack.c.l.b16 %v193
    %v1353 = vunpack.c.l.b16 %v194
    %v1354 = vunpack.c.l.b16 %v195
    %v1355 = vunpack.c.l.b16 %v196
    %v1356 = vunpack.c.l.b16 %v197
    %v1357 = vunpack.c.l.b16 %v198
    %v1358 = vunpack.c.l.b16 %v199
    %v1359 = vunpack.c.l.b16 %v200
    %v1360 = vunpack.c.l.b16 %v201
    %v1361 = vunpack.c.l.b16 %v202
    %v1362 = vunpack.c.l.b16 %v203
    %v1363 = vunpack.c.l.b16 %v204
    %v1364 = vunpack.c.l.b16 %v205
    %v1365 = vunpack.c.l.b16 %v206
    %v1366 = vunpack.c.l.b16 %v207
    %v1367 = vunpack.c.l.b16 %v208
    %v1368 = vunpack.c.l.b16 %v209
    %v1369 = vunpack.c.l.b16 %v210
    %v1370 = vunpack.c.l.b16 %v211
    %v1371 = vunpack.c.l.b16 %v212
    %v1372 = vunpack.c.l.b16 %v213
    %v1373 = vunpack.c.l.b16 %v214
    %v1374 = vunpack.c.l.b16 %v215
    %v1375 = vunpack.c.l.b16 %v216
    %v1376 = vunpack.c.l.b16 %v217
    %v1377 = vunpack.c.l.b16 %v218
    %v1378 = vunpack.c.l.b16 %v219
    %v1379 = vunpack.c.l.b16 %v220
    %v1380 = vunpack.c.l.b16 %v221
    %v1381 = vunpack.c.l.b16 %v222
    %v1382 = vunpack.c.l.b16 %v223
    %v1383 = vunpack.c.l.b16 %v224
    %v1384 = vunpack.c.l.b16 %v225
    %v1385 = vunpack.c.l.b16 %v226
    %v1386 = vunpack.c.l.b16 %v227
    %v1387 = vunpack.c.l.b16 %v228
    %v1388 = vunpack.c.l.b16 %v229
    %v1389 = vunpack.c.l.b16 %v230
    %v1390 = vunpack.c.l.b16 %v231
    %v1391 = vunpack.c.l.b16 %v232
    %v1392 = vunpack.c.l.b16 %v233
    %v1393 = vunpack.c.l.b16 %v234
    %v1394 = vunpack.c.l.b16 %v235
    %v1395 = vunpack.c.l.b16 %v236
    %v1396 = vunpack.c.l.b16 %v237
    %v1397 = vunpack.c.l.b16 %v238
    %v1398 = vunpack.c.l.b16 %v239
    %v1399 = vunpack.c.l.b16 %v240
    %v1400 = vunpack.c.l.b16 %v241
    %v1401 = vunpack.c.l.b16 %v242
    %v1402 = vunpack.c.l.b16 %v243
    %v1403 = vunpack.c.l.b16 %v244
    %v1404 = vunpack.c.l.b16 %v245
    %v1405 = vunpack.c.l.b16 %v246
    %v1406 = vunpack.c.l.b16 %v247
    %v1407 = vunpack.c.l.b16 %v248
    %v1408 = vunpack.c.l.b16 %v249
    %v1409 = vunpack.c.l.b16 %v250
    %v1410 = vunpack.c.l.b16 %v251
    %v1411 = vunpack.c.l.b16 %v252
    %v1412 = vunpack.c.l.b16 %v253
    %v1413 = vunpack.c.l.b16 %v254
    %v1414 = vunpack.c.l.b16 %v255
    %v1415 = vunpack.c.l.b16 %v256
    %v1416 = vunpack.c.l.b16 %v257
    %v1417 = vunpack.c.l.b16 %v258
    %v1418 = vunpack.c.l.b16 %v259
    %v1419 = vunpack.c.l.b16 %v260
    %v1420 = vunpack.c.l.b16 %v261
    %v1421 = vunpack.c.l.b16 %v262
    %v1422 = vunpack.c.l.b16 %v263
    %v1423 = vunpack.c.l.b16 %v264
    %v1424 = vunpack.c.l.b16 %v265
    %v1425 = vunpack.c.l.b16 %v266
    %v1426 = vunpack.c.l.b16 %v267
    %v1427 = vunpack.c.l.b16 %v268
    %v1428 = vunpack.c.l.b16 %v269
    %v1429 = vunpack.c.l.b16 %v270
    %v1430 = vunpack.c.l.b16 %v271
    %v1431 = vunpack.c.l.b16 %v272
    %v1432 = vunpack.c.l.b16 %v273
    %v1433 = vunpack.c.l.b16 %v274
    %v1434 = vunpack.c.l.b16 %v275
    %v1435 = vunpack.c.l.b16 %v276
    %v1436 = vunpack.c.l.b16 %v277
    %v1437 = vunpack.c.l.b16 %v278
    %v1438 = vunpack.c.l.b16 %v279
    %v1439 = vunpack.c.l.b16 %v280
    %v1440 = vunpack.c.l.b16 %v281
    %v1441 = vunpack.c.l.b16 %v282
    %v1442 = vunpack.c.l.b16 %v283
    %v1443 = vunpack.c.l.b16 %v284
    %v1444 = vunpack.c.l.b16 %v285
    %v1445 = vunpack.c.l.b16 %v286
    %v1446 = vunpack.c.l.b16 %v287
    %v1447 = vunpack.c.l.b16 %v288
    %v1448 = vunpack.c.l.b16 %v289
    %v1449 = vunpack.c.l.b16 %v290
    %v1450 = vunpack.c.l.b16 %v291
    %v1451 = vunpack.c.l.b16 %v292
    %v1452 = vunpack.c.l.b16 %v293
    %v1453 = vunpack.c.l.b16 %v294
    %v1454 = vunpack.c.l.b16 %v295
    %v1455 = vunpack.c.l.b16 %v296
    %v1456 = vunpack.c.l.b16 %v297
    %v1457 = vunpack.c.l.b16 %v298
    %v1458 = vunpack.c.l.b16 %v299
    %v1459 = vunpack.c.l.b16 %v300
    %v1460 = vunpack.c.l.b16 %v301
    %v1461 = vunpack.c.l.b16 %v302
    %v1462 = vunpack.c.l.b16 %v303
    %v1463 = vunpack.c.l.b16 %v304
    %v1464 = vunpack.c.l.b16 %v305
    %v1465 = vunpack.c.l.b16 %v306
    %v1466 = vunpack.c.l.b16 %v307
    %v1467 = vunpack.c.l.b16 %v308
    %v1468 = vunpack.c.l.b16 %v309
    %v1469 = vunpack.c.l.b16 %v310
    %v1470 = vunpack.c.l.b16 %v311
    %v1471 = vunpack.c.l.b16 %v312
    %v1472 = vunpack.c.l.b16 %v313
    %v1473 = vunpack.c.l.b16 %v314
    %v1474 = vunpack.c.l.b16 %v315
    %v1475 = vunpack.c.l.b16 %v316
    %v1476 = vunpack.c.l.b16 %v317
    %v1477 = vunpack.c.l.b16 %v318
    %v1478 = vunpack.c.l.b16 %v319
    %v1479 = vunpack.c.l.b16 %v320
    %v1480 = vunpack.c.l.b16 %v321
    %v1481 = vunpack.c.l.b16 %v322
    %v1482 = vunpack.c.l.b16 %v323
    %v1483 = vunpack.c.l.b16 %v324
    %v1484 = vunpack.c.l.b16 %v325
    %v1485 = vunpack.c.l.b16 %v326
    %v1486 = vunpack.c.l.b16 %v327
    %v1487 = vunpack.c.l.b16 %v328
    %v1488 = vunpack.c.l.b16 %v329
    %v1489 = vunpack.c.l.b16 %v330
    %v1490 = vunpack.c.l.b16 %v331
    %v1491 = vunpack.c.l.b16 %v332
    %v1492 = vunpack.c.l.b16 %v333
    %v1493 = vunpack.c.l.b16 %v334
    %v1494 = vunpack.c.l.b16 %v335
    %v1495 = vunpack.c.l.b16 %v336
    %v1496 = vunpack.c.l.b16 %v337
    %v1497 = vunpack.c.l.b16 %v338
    %v1498 = vunpack.c.l.b16 %v339
    %v1499 = vunpack.c.l.b16 %v340
    %v1500 = vunpack.c.l.b16 %v341
    %v1501 = vunpack.c.l.b16 %v342
    %v1502 = vunpack.c.l.b16 %v343
    %v1503 = vunpack.c.l.b16 %v344
    %v1504 = vunpack.c.l.b16 %v345
    %v1505 = vunpack.c.l.b16 %v346
    %v1506 = vunpack.c.l.b16 %v347
    %v1507 = vunpack.c.l.b16 %v348
    %v1508 = vunpack.c.l.b16 %v349
    %v1509 = vunpack.c.l.b16 %v350
    %v1510 = vunpack.c.l.b16 %v351
    %v1511 = vunpack.c.l.b16 %v352
    %v1512 = vunpack.c.l.b16 %v353
    %v1513 = vunpack.c.l.b16 %v354
    %v1514 = vunpack.c.l.b16 %v355
    %v1515 = vunpack.c.l.b16 %v356
    %v1516 = vunpack.c.l.b16 %v357
    %v1517 = vunpack.c.l.b16 %v358
    %v1518 = vunpack.c.l.b16 %v359
    %v1519 = vunpack.c.l.b16 %v360
    %v1520 = vunpack.c.l.b16 %v361
    %v1521 = vunpack.c.l.b16 %v362
    %v1522 = vunpack.c.l.b16 %v363
    %v1523 = vunpack.c.l.b16 %v364
    %v1524 = vunpack.c.l.b16 %v365
    %v1525 = vunpack.c.l.b16 %v366
    %v1526 = vunpack.c.l.b16 %v367
    %v1527 = vunpack.c.l.b16 %v368
    %v1528 = vunpack.c.l.b16 %v369
    %v1529 = vunpack.c.l.b16 %v370
    %v1530 = vunpack.c.l.b16 %v371
    %v1531 = vunpack.c.l.b16 %v372
    %v1532 = vunpack.c.l.b16 %v373
    %v1533 = vunpack.c.l.b16 %v374
    %v1534 = vunpack.c.l.b16 %v375
    %v1535 = vunpack.c.l.b16 %v376
    %v1536 = vunpack.c.l.b16 %v377
    %v1537 = vunpack.c.l.b16 %v378
    %v1538 = vunpack.c.l.b16 %v379
    %v1539 = vunpack.c.l.b16 %v380
    %v1540 = vunpack.c.l.b16 %v381
    %v1541 = vunpack.c.l.b16 %v382
    %v1542 = vunpack.c.l.b16 %v383
    %v1543 = vunpack.c.l.b16 %v384
    %v1544 = vunpack.c.l.b16 %v385
    %v1545 = vunpack.c.l.b16 %v386
    %v1546 = vunpack.c.l.b16 %v387
    %v1547 = vunpack.c.l.b16 %v388
    %v1548 = vunpack.c.l.b16 %v389
    %v1549 = vunpack.c.l.b16 %v390
    %v1550 = vunpack.c.l.b16 %v391
    %v1551 = vunpack.c.l.b16 %v392
    %v1552 = vunpack.c.l.b16 %v393
    %v1553 = vunpack.c.l.b16 %v394
    %v1554 = vunpack.c.l.b16 %v395
    %v1555 = vunpack.c.l.b16 %v396
    %v1556 = vunpack.c.l.b16 %v397
    %v1557 = vunpack.c.l.b16 %v398
    %v1558 = vunpack.c.l.b16 %v399
    %v1559 = vunpack.c.l.b16 %v400
    %v1560 = vunpack.c.l.b16 %v401
    %v1561 = vunpack.c.l.b16 %v402
    %v1562 = vunpack.c.l.b16 %v403
    %v1563 = vunpack.c.l.b16 %v404
    %v1564 = vunpack.c.l.b16 %v405
    %v1565 = vunpack.c.l.b16 %v406
    %v1566 = vunpack.c.l.b16 %v407
    %v1567 = vunpack.c.l.b16 %v408
    %v1568 = vunpack.c.l.b16 %v409
    %v1569 = vunpack.c.l.b16 %v410
    %v1570 = vunpack.c.l.b16 %v411
    %v1571 = vunpack.c.l.b16 %v412
    %v1572 = vunpack.c.l.b16 %v413
    %v1573 = vunpack.c.l.b16 %v414
    %v1574 = vunpack.c.l.b16 %v415
    %v1575 = vunpack.c.l.b16 %v416
    %v1576 = vunpack.c.l.b16 %v417
    %v1577 = vunpack.c.l.b16 %v418
    %v1578 = vunpack.c.l.b16 %v419
    %v1579 = vunpack.c.l.b16 %v420
    %v1580 = vunpack.c.l.b16 %v421
    %v1581 = vunpack.c.l.b16 %v422
    %v1582 = vunpack.c.l.b16 %v423
    %v1583 = vunpack.c.l.b16 %v424
    %v1584 = vunpack.c.l.b16 %v425
    %v1585 = vunpack.c.l.b16 %v426
    %v1586 = vunpack.c.l.b16 %v427
    %v1587 = vunpack.c.l.b16 %v428
    %v1588 = vunpack.c.l.b16 %v429
    %v1589 = vunpack.c.l.b16 %v430
    %v1590 = vunpack.c.l.b16 %v431
    %v1591 = vunpack.c.l.b16 %v432
    %v1592 = vunpack.c.l.b16 %v433
    %v1593 = vpack.c.b16 %v1338, %v1337
    %v1594 = vpack.c.b16 %v1340, %v1339
    %v1595 = vpack.c.b16 %v1342, %v1341
    %v1596 = vpack.c.b16 %v1344, %v1343
    %v1597 = vpack.c.b16 %v1346, %v1345
    %v1598 = vpack.c.b16 %v1348, %v1347
    %v1599 = vpack.c.b16 %v1350, %v1349
    %v1600 = vpack.c.b16 %v1352, %v1351
    %v1601 = vpack.c.b16 %v1354, %v1353
    %v1602 = vpack.c.b16 %v1356, %v1355
    %v1603 = vpack.c.b16 %v1358, %v1357
    %v1604 = vpack.c.b16 %v1360, %v1359
    %v1605 = vpack.c.b16 %v1362, %v1361
    %v1606 = vpack.c.b16 %v1364, %v1363
    %v1607 = vpack.c.b16 %v1366, %v1365
    %v1608 = vpack.c.b16 %v1368, %v1367
    %v1609 = vpack.c.b16 %v1370, %v1369
    %v1610 = vpack.c.b16 %v1372, %v1371
    %v1611 = vpack.c.b16 %v1374, %v1373
    %v1612 = vpack.c.b16 %v1376, %v1375
    %v1613 = vpack.c.b16 %v1378, %v1377
    %v1614 = vpack.c.b16 %v1380, %v1379
    %v1615 = vpack.c.b16 %v1382, %v1381
    %v1616 = vpack.c.b16 %v1384, %v1383
    %v1617 = vpack.c.b16 %v1386, %v1385
    %v1618 = vpack.c.b16 %v1388, %v1387
    %v1619 = vpack.c.b16 %v1390, %v1389
    %v1620 = vpack.c.b16 %v1392, %v1391
    %v1621 = vpack.c.b16 %v1394, %v1393
    %v1622 = vpack.c.b16 %v1396, %v1395
    %v1623 = vpack.c.b16 %v1398, %v1397
    %v1624 = vpack.c.b16 %v1400, %v1399
    %v1625 = vpack.c.b16 %v1402, %v1401
    %v1626 = vpack.c.b16 %v1404, %v1403
    %v1627 = vpack.c.b16 %v1406, %v1405
    %v1628 = vpack.c.b16 %v1408, %v1407
    %v1629 = vpack.c.b16 %v1410, %v1409
    %v1630 = vpack.c.b16 %v1412, %v1411
    %v1631 = vpack.c.b16 %v1414, %v1413
    %v1632 = vpack.c.b16 %v1416, %v1415
    %v1633 = vpack.c.b16 %v1418, %v1417
    %v1634 = vpack.c.b16 %v1420, %v1419
    %v1635 = vpack.c.b16 %v1422, %v1421
    %v1636 = vpack.c.b16 %v1424, %v1423
    %v1637 = vpack.c.b16 %v1426, %v1425
    %v1638 = vpack.c.b16 %v1428, %v1427
    %v1639 = vpack.c.b16 %v1430, %v1429
    %v1640 = vpack.c.b16 %v1432, %v1431
    %v1641 = vpack.c.b16 %v1434, %v1433
    %v1642 = vpack.c.b16 %v1436, %v1435
    %v1643 = vpack.c.b16 %v1438, %v1437
    %v1644 = vpack.c.b16 %v1440, %v1439
    %v1645 = vpack.c.b16 %v1442, %v1441
    %v1646 = vpack.c.b16 %v1444, %v1443
    %v1647 = vpack.c.b16 %v1446, %v1445
    %v1648 = vpack.c.b16 %v1448, %v1447
    %v1649 = vpack.c.b16 %v1450, %v1449
    %v1650 = vpack.c.b16 %v1452, %v1451
    %v1651 = vpack.c.b16 %v1454, %v1453
    %v1652 = vpack.c.b16 %v1456, %v1455
    %v1653 = vpack.c.b16 %v1458, %v1457
    %v1654 = vpack.c.b16 %v1460, %v1459
    %v1655 = vpack.c.b16 %v1462, %v1461
    %v1656 = vpack.c.b16 %v1464, %v1463
    %v1657 = vpack.c.b16 %v1466, %v1465
    %v1658 = vpack.c.b16 %v1468, %v1467
    %v1659 = vpack.c.b16 %v1470, %v1469
    %v1660 = vpack.c.b16 %v1472, %v1471
    %v1661 = vpack.c.b16 %v1474, %v1473
    %v1662 = vpack.c.b16 %v1476, %v1475
    %v1663 = vpack.c.b16 %v1478, %v1477
    %v1664 = vpack.c.b16 %v1480, %v1479
    %v1665 = vpack.c.b16 %v1482, %v1481
    %v1666 = vpack.c.b16 %v1484, %v1483
    %v1667 = vpack.c.b16 %v1486, %v1485
    %v1668 = vpack.c.b16 %v1488, %v1487
    %v1669 = vpack.c.b16 %v1490, %v1489
    %v1670 = vpack.c.b16 %v1492, %v1491
    %v1671 = vpack.c.b16 %v1494, %v1493
    %v1672 = vpack.c.b16 %v1496, %v1495
    %v1673 = vpack.c.b16 %v1498, %v1497
    %v1674 = vpack.c.b16 %v1500, %v1499
    %v1675 = vpack.c.b16 %v1502, %v1501
    %v1676 = vpack.c.b16 %v1504, %v1503
    %v1677 = vpack.c.b16 %v1506, %v1505
    %v1678 = vpack.c.b16 %v1508, %v1507
    %v1679 = vpack.c.b16 %v1510, %v1509
    %v1680 = vpack.c.b16 %v1512, %v1511
    %v1681 = vpack.c.b16 %v1514, %v1513
    %v1682 = vpack.c.b16 %v1516, %v1515
    %v1683 = vpack.c.b16 %v1518, %v1517
    %v1684 = vpack.c.b16 %v1520, %v1519
    %v1685 = vpack.c.b16 %v1522, %v1521
    %v1686 = vpack.c.b16 %v1524, %v1523
    %v1687 = vpack.c.b16 %v1526, %v1525
    %v1688 = vpack.c.b16 %v1528, %v1527
    %v1689 = vpack.c.b16 %v1530, %v1529
    %v1690 = vpack.c.b16 %v1532, %v1531
    %v1691 = vpack.c.b16 %v1534, %v1533
    %v1692 = vpack.c.b16 %v1536, %v1535
    %v1693 = vpack.c.b16 %v1538, %v1537
    %v1694 = vpack.c.b16 %v1540, %v1539
    %v1695 = vpack.c.b16 %v1542, %v1541
    %v1696 = vpack.c.b16 %v1544, %v1543
    %v1697 = vpack.c.b16 %v1546, %v1545
    %v1698 = vpack.c.b16 %v1548, %v1547
    %v1699 = vpack.c.b16 %v1550, %v1549
    %v1700 = vpack.c.b16 %v1552, %v1551
    %v1701 = vpack.c.b16 %v1554, %v1553
    %v1702 = vpack.c.b16 %v1556, %v1555
    %v1703 = vpack.c.b16 %v1558, %v1557
    %v1704 = vpack.c.b16 %v1560, %v1559
    %v1705 = vpack.c.b16 %v1562, %v1561
    %v1706 = vpack.c.b16 %v1564, %v1563
    %v1707 = vpack.c.b16 %v1566, %v1565
    %v1708 = vpack.c.b16 %v1568, %v1567
    %v1709 = vpack.c.b16 %v1570, %v1569
    %v1710 = vpack.c.b16 %v1572, %v1571
    %v1711 = vpack.c.b16 %v1574, %v1573
    %v1712 = vpack.c.b16 %v1576, %v1575
    %v1713 = vpack.c.b16 %v1578, %v1577
    %v1714 = vpack.c.b16 %v1580, %v1579
    %v1715 = vpack.c.b16 %v1582, %v1581
    %v1716 = vpack.c.b16 %v1584, %v1583
    %v1717 = vpack.c.b16 %v1586, %v1585
    %v1718 = vpack.c.b16 %v1588, %v1587
    %v1719 = vpack.c.b16 %v1590, %v1589
    %v1720 = vpack.c.b16 %v1592, %v1591
    %1849 = vmatprep.subr.bf16.mxu0 0
    %1850 = vmatpush1.bf16.msra.mxu0 %v1593
    %1851 = vmatprep.subr.bf16.mxu0 0
    %1852 = vmatpush1.bf16.msra.mxu0 %v1594
    %1853 = vmatprep.subr.bf16.mxu0 0
    %1854 = vmatpush1.bf16.msra.mxu0 %v1595
    %1855 = vmatprep.subr.bf16.mxu0 0
    %1856 = vmatpush1.bf16.msra.mxu0 %v1596
    %1857 = vmatprep.subr.bf16.mxu0 0
    %1858 = vmatpush1.bf16.msra.mxu0 %v1597
    %1859 = vmatprep.subr.bf16.mxu0 0
    %1860 = vmatpush1.bf16.msra.mxu0 %v1598
    %1861 = vmatprep.subr.bf16.mxu0 0
    %1862 = vmatpush1.bf16.msra.mxu0 %v1599
    %1863 = vmatprep.subr.bf16.mxu0 0
    %1864 = vmatpush1.bf16.msra.mxu0 %v1600
    %1865 = vmatprep.subr.bf16.mxu0 0
    %1866 = vmatpush1.bf16.msra.mxu0 %v1601
    %1867 = vmatprep.subr.bf16.mxu0 0
    %1868 = vmatpush1.bf16.msra.mxu0 %v1602
    %1869 = vmatprep.subr.bf16.mxu0 0
    %1870 = vmatpush1.bf16.msra.mxu0 %v1603
    %1871 = vmatprep.subr.bf16.mxu0 0
    %1872 = vmatpush1.bf16.msra.mxu0 %v1604
    %1873 = vmatprep.subr.bf16.mxu0 0
    %1874 = vmatpush1.bf16.msra.mxu0 %v1605
    %1875 = vmatprep.subr.bf16.mxu0 0
    %1876 = vmatpush1.bf16.msra.mxu0 %v1606
    %1877 = vmatprep.subr.bf16.mxu0 0
    %1878 = vmatpush1.bf16.msra.mxu0 %v1607
    %1879 = vmatprep.subr.bf16.mxu0 0
    %1880 = vmatpush1.bf16.msra.mxu0 %v1608
    %1881 = vmatprep.mubr.bf16.mxu0 %v826
    %1882 = vmatmul.mubr.bf16.gmra.mrb[0].mxu0 %v825
    %v1883 = vpop.f32.mrb[0].mxu0
    %v1884 = vadd.f32 %v439, %v1883
    %v1885 = vpop.f32.mrb[0].mxu0
    %v1886 = vpop.f32.mrb[0].mxu0
    %v1887 = vadd.f32 %v439, %v1886
    %v1888 = vpop.f32.mrb[0].mxu0
    %1889 = vmatprep.mubr.bf16.mxu0 %v842
    %1890 = vmatmul.mubr.bf16.gmra.mrb[0].mxu0 %v841
    %v1891 = vpop.f32.mrb[0].mxu0
    %v1892 = vadd.f32 %v439, %v1891
    %v1893 = vpop.f32.mrb[0].mxu0
    %v1894 = vpop.f32.mrb[0].mxu0
    %v1895 = vadd.f32 %v439, %v1894
    %v1896 = vpop.f32.mrb[0].mxu0
    %1897 = vmatprep.mubr.bf16.mxu0 %v858
    %1898 = vmatmul.mubr.bf16.gmra.mrb[0].mxu0 %v857
    %v1899 = vpop.f32.mrb[0].mxu0
    %v1900 = vadd.f32 %v439, %v1899
    %v1901 = vpop.f32.mrb[0].mxu0
    %v1902 = vpop.f32.mrb[0].mxu0
    %v1903 = vadd.f32 %v439, %v1902
    %v1904 = vpop.f32.mrb[0].mxu0
    %1905 = vmatprep.mubr.bf16.mxu0 %v874
    %1906 = vmatmul.mubr.bf16.gmra.mrb[0].mxu0 %v873
    %v1907 = vpop.f32.mrb[0].mxu0
    %v1908 = vadd.f32 %v439, %v1907
    %v1909 = vpop.f32.mrb[0].mxu0
    %v1910 = vpop.f32.mrb[0].mxu0
    %v1911 = vadd.f32 %v439, %v1910
    %v1912 = vpop.f32.mrb[0].mxu0
    %1913 = vmatprep.mubr.bf16.mxu0 %v890
    %1914 = vmatmul.mubr.bf16.gmra.mrb[0].mxu0 %v889
    %v1915 = vpop.f32.mrb[0].mxu0
    %v1916 = vadd.f32 %v439, %v1915
    %v1917 = vpop.f32.mrb[0].mxu0
    %v1918 = vpop.f32.mrb[0].mxu0
    %v1919 = vadd.f32 %v439, %v1918
    %v1920 = vpop.f32.mrb[0].mxu0
    %1921 = vmatprep.mubr.bf16.mxu0 %v906
    %1922 = vmatmul.mubr.bf16.gmra.mrb[0].mxu0 %v905
    %v1923 = vpop.f32.mrb[0].mxu0
    %v1924 = vadd.f32 %v439, %v1923
    %v1925 = vpop.f32.mrb[0].mxu0
    %v1926 = vpop.f32.mrb[0].mxu0
    %v1927 = vadd.f32 %v439, %v1926
    %v1928 = vpop.f32.mrb[0].mxu0
    %1929 = vmatprep.mubr.bf16.mxu0 %v922
    %1930 = vmatmul.mubr.bf16.gmra.mrb[0].mxu0 %v921
    %v1931 = vpop.f32.mrb[0].mxu0
    %v1932 = vadd.f32 %v439, %v1931
    %v1933 = vpop.f32.mrb[0].mxu0
    %v1934 = vpop.f32.mrb[0].mxu0
    %v1935 = vadd.f32 %v439, %v1934
    %v1936 = vpop.f32.mrb[0].mxu0
    %1937 = vmatprep.mubr.bf16.mxu0 %v938
    %1938 = vmatmul.mubr.bf16.gmra.mrb[0].mxu0 %v937
    %v1939 = vpop.f32.mrb[0].mxu0
    %v1940 = vadd.f32 %v439, %v1939
    %v1941 = vpop.f32.mrb[0].mxu0
    %v1942 = vpop.f32.mrb[0].mxu0
    %v1943 = vadd.f32 %v439, %v1942
    %v1944 = vpop.f32.mrb[0].mxu0
    %1945 = vdwg.mxu0
    %1946 = vmatprep.subr.bf16.mxu0 0
    %1947 = vmatpush1.bf16.msra.mxu0 %v1609
    %1948 = vmatprep.subr.bf16.mxu0 0
    %1949 = vmatpush1.bf16.msra.mxu0 %v1610
    %1950 = vmatprep.subr.bf16.mxu0 0
    %1951 = vmatpush1.bf16.msra.mxu0 %v1611
    %1952 = vmatprep.subr.bf16.mxu0 0
    %1953 = vmatpush1.bf16.msra.mxu0 %v1612
    %1954 = vmatprep.subr.bf16.mxu0 0
    %1955 = vmatpush1.bf16.msra.mxu0 %v1613
    %1956 = vmatprep.subr.bf16.mxu0 0
    %1957 = vmatpush1.bf16.msra.mxu0 %v1614
    %1958 = vmatprep.subr.bf16.mxu0 0
    %1959 = vmatpush1.bf16.msra.mxu0 %v1615
    %1960 = vmatprep.subr.bf16.mxu0 0
    %1961 = vmatpush1.bf16.msra.mxu0 %v1616
    %1962 = vmatprep.subr.bf16.mxu0 0
    %1963 = vmatpush1.bf16.msra.mxu0 %v1617
    %1964 = vmatprep.subr.bf16.mxu0 0
    %1965 = vmatpush1.bf16.msra.mxu0 %v1618
    %1966 = vmatprep.subr.bf16.mxu0 0
    %1967 = vmatpush1.bf16.msra.mxu0 %v1619
    %1968 = vmatprep.subr.bf16.mxu0 0
    %1969 = vmatpush1.bf16.msra.mxu0 %v1620
    %1970 = vmatprep.subr.bf16.mxu0 0
    %1971 = vmatpush1.bf16.msra.mxu0 %v1621
    %1972 = vmatprep.subr.bf16.mxu0 0
    %1973 = vmatpush1.bf16.msra.mxu0 %v1622
    %1974 = vmatprep.subr.bf16.mxu0 0
    %1975 = vmatpush1.bf16.msra.mxu0 %v1623
    %1976 = vmatprep.subr.bf16.mxu0 0
    %1977 = vmatpush1.bf16.msra.mxu0 %v1624
    %1978 = vmatprep.mubr.bf16.mxu0 %v828
    %1979 = vmatmul.mubr.bf16.gmra.mrb[0].mxu0 %v827
    %v1980 = vpop.f32.mrb[0].mxu0
    %v1981 = vadd.f32 %v1884, %v1980
    %v1982 = vpop.f32.mrb[0].mxu0
    %v1983 = vpop.f32.mrb[0].mxu0
    %v1984 = vadd.f32 %v1887, %v1983
    %v1985 = vpop.f32.mrb[0].mxu0
    %1986 = vmatprep.mubr.bf16.mxu0 %v844
    %1987 = vmatmul.mubr.bf16.gmra.mrb[0].mxu0 %v843
    %v1988 = vpop.f32.mrb[0].mxu0
    %v1989 = vadd.f32 %v1892, %v1988
    %v1990 = vpop.f32.mrb[0].mxu0
    %v1991 = vpop.f32.mrb[0].mxu0
    %v1992 = vadd.f32 %v1895, %v1991
    %v1993 = vpop.f32.mrb[0].mxu0
    %1994 = vmatprep.mubr.bf16.mxu0 %v860
    %1995 = vmatmul.mubr.bf16.gmra.mrb[0].mxu0 %v859
    %v1996 = vpop.f32.mrb[0].mxu0
    %v1997 = vadd.f32 %v1900, %v1996
    %v1998 = vpop.f32.mrb[0].mxu0
    %v1999 = vpop.f32.mrb[0].mxu0
    %v2000 = vadd.f32 %v1903, %v1999
    %v2001 = vpop.f32.mrb[0].mxu0
    %2002 = vmatprep.mubr.bf16.mxu0 %v876
    %2003 = vmatmul.mubr.bf16.gmra.mrb[0].mxu0 %v875
    %v2004 = vpop.f32.mrb[0].mxu0
    %v2005 = vadd.f32 %v1908, %v2004
    %v2006 = vpop.f32.mrb[0].mxu0
    %v2007 = vpop.f32.mrb[0].mxu0
    %v2008 = vadd.f32 %v1911, %v2007
    %v2009 = vpop.f32.mrb[0].mxu0
    %2010 = vmatprep.mubr.bf16.mxu0 %v892
    %2011 = vmatmul.mubr.bf16.gmra.mrb[0].mxu0 %v891
    %v2012 = vpop.f32.mrb[0].mxu0
    %v2013 = vadd.f32 %v1916, %v2012
    %v2014 = vpop.f32.mrb[0].mxu0
    %v2015 = vpop.f32.mrb[0].mxu0
    %v2016 = vadd.f32 %v1919, %v2015
    %v2017 = vpop.f32.mrb[0].mxu0
    %2018 = vmatprep.mubr.bf16.mxu0 %v908
    %2019 = vmatmul.mubr.bf16.gmra.mrb[0].mxu0 %v907
    %v2020 = vpop.f32.mrb[0].mxu0
    %v2021 = vadd.f32 %v1924, %v2020
    %v2022 = vpop.f32.mrb[0].mxu0
    %v2023 = vpop.f32.mrb[0].mxu0
    %v2024 = vadd.f32 %v1927, %v2023
    %v2025 = vpop.f32.mrb[0].mxu0
    %2026 = vmatprep.mubr.bf16.mxu0 %v924
    %2027 = vmatmul.mubr.bf16.gmra.mrb[0].mxu0 %v923
    %v2028 = vpop.f32.mrb[0].mxu0
    %v2029 = vadd.f32 %v1932, %v2028
    %v2030 = vpop.f32.mrb[0].mxu0
    %v2031 = vpop.f32.mrb[0].mxu0
    %v2032 = vadd.f32 %v1935, %v2031
    %v2033 = vpop.f32.mrb[0].mxu0
    %2034 = vmatprep.mubr.bf16.mxu0 %v940
    %2035 = vmatmul.mubr.bf16.gmra.mrb[0].mxu0 %v939
    %v2036 = vpop.f32.mrb[0].mxu0
    %v2037 = vadd.f32 %v1940, %v2036
    %v2038 = vpop.f32.mrb[0].mxu0
    %v2039 = vpop.f32.mrb[0].mxu0
    %v2040 = vadd.f32 %v1943, %v2039
    %v2041 = vpop.f32.mrb[0].mxu0
    %2042 = vdwg.mxu0
    %2043 = vmatprep.subr.bf16.mxu0 0
    %2044 = vmatpush1.bf16.msra.mxu0 %v1625
    %2045 = vmatprep.subr.bf16.mxu0 0
    %2046 = vmatpush1.bf16.msra.mxu0 %v1626
    %2047 = vmatprep.subr.bf16.mxu0 0
    %2048 = vmatpush1.bf16.msra.mxu0 %v1627
    %2049 = vmatprep.subr.bf16.mxu0 0
    %2050 = vmatpush1.bf16.msra.mxu0 %v1628
    %2051 = vmatprep.subr.bf16.mxu0 0
    %2052 = vmatpush1.bf16.msra.mxu0 %v1629
    %2053 = vmatprep.subr.bf16.mxu0 0
    %2054 = vmatpush1.bf16.msra.mxu0 %v1630
    %2055 = vmatprep.subr.bf16.mxu0 0
    %2056 = vmatpush1.bf16.msra.mxu0 %v1631
    %2057 = vmatprep.subr.bf16.mxu0 0
    %2058 = vmatpush1.bf16.msra.mxu0 %v1632
    %2059 = vmatprep.subr.bf16.mxu0 0
    %2060 = vmatpush1.bf16.msra.mxu0 %v1633
    %2061 = vmatprep.subr.bf16.mxu0 0
    %2062 = vmatpush1.bf16.msra.mxu0 %v1634
    %2063 = vmatprep.subr.bf16.mxu0 0
    %2064 = vmatpush1.bf16.msra.mxu0 %v1635
    %2065 = vmatprep.subr.bf16.mxu0 0
    %2066 = vmatpush1.bf16.msra.mxu0 %v1636
    %2067 = vmatprep.subr.bf16.mxu0 0
    %2068 = vmatpush1.bf16.msra.mxu0 %v1637
    %2069 = vmatprep.subr.bf16.mxu0 0
    %2070 = vmatpush1.bf16.msra.mxu0 %v1638
    %2071 = vmatprep.subr.bf16.mxu0 0
    %2072 = vmatpush1.bf16.msra.mxu0 %v1639
    %2073 = vmatprep.subr.bf16.mxu0 0
    %2074 = vmatpush1.bf16.msra.mxu0 %v1640
    %2075 = vmatprep.mubr.bf16.mxu0 %v830
    %2076 = vmatmul.mubr.bf16.gmra.mrb[0].mxu0 %v829
    %v2077 = vpop.f32.mrb[0].mxu0
    %v2078 = vadd.f32 %v1981, %v2077
    %v2079 = vpop.f32.mrb[0].mxu0
    %v2080 = vpop.f32.mrb[0].mxu0
    %v2081 = vadd.f32 %v1984, %v2080
    %v2082 = vpop.f32.mrb[0].mxu0
    %2083 = vmatprep.mubr.bf16.mxu0 %v846
    %2084 = vmatmul.mubr.bf16.gmra.mrb[0].mxu0 %v845
    %v2085 = vpop.f32.mrb[0].mxu0
    %v2086 = vadd.f32 %v1989, %v2085
    %v2087 = vpop.f32.mrb[0].mxu0
    %v2088 = vpop.f32.mrb[0].mxu0
    %v2089 = vadd.f32 %v1992, %v2088
    %v2090 = vpop.f32.mrb[0].mxu0
    %2091 = vmatprep.mubr.bf16.mxu0 %v862
    %2092 = vmatmul.mubr.bf16.gmra.mrb[0].mxu0 %v861
    %v2093 = vpop.f32.mrb[0].mxu0
    %v2094 = vadd.f32 %v1997, %v2093
    %v2095 = vpop.f32.mrb[0].mxu0
    %v2096 = vpop.f32.mrb[0].mxu0
    %v2097 = vadd.f32 %v2000, %v2096
    %v2098 = vpop.f32.mrb[0].mxu0
    %2099 = vmatprep.mubr.bf16.mxu0 %v878
    %2100 = vmatmul.mubr.bf16.gmra.mrb[0].mxu0 %v877
    %v2101 = vpop.f32.mrb[0].mxu0
    %v2102 = vadd.f32 %v2005, %v2101
    %v2103 = vpop.f32.mrb[0].mxu0
    %v2104 = vpop.f32.mrb[0].mxu0
    %v2105 = vadd.f32 %v2008, %v2104
    %v2106 = vpop.f32.mrb[0].mxu0
    %2107 = vmatprep.mubr.bf16.mxu0 %v894
    %2108 = vmatmul.mubr.bf16.gmra.mrb[0].mxu0 %v893
    %v2109 = vpop.f32.mrb[0].mxu0
    %v2110 = vadd.f32 %v2013, %v2109
    %v2111 = vpop.f32.mrb[0].mxu0
    %v2112 = vpop.f32.mrb[0].mxu0
    %v2113 = vadd.f32 %v2016, %v2112
    %v2114 = vpop.f32.mrb[0].mxu0
    %2115 = vmatprep.mubr.bf16.mxu0 %v910
    %2116 = vmatmul.mubr.bf16.gmra.mrb[0].mxu0 %v909
    %v2117 = vpop.f32.mrb[0].mxu0
    %v2118 = vadd.f32 %v2021, %v2117
    %v2119 = vpop.f32.mrb[0].mxu0
    %v2120 = vpop.f32.mrb[0].mxu0
    %v2121 = vadd.f32 %v2024, %v2120
    %v2122 = vpop.f32.mrb[0].mxu0
    %2123 = vmatprep.mubr.bf16.mxu0 %v926
    %2124 = vmatmul.mubr.bf16.gmra.mrb[0].mxu0 %v925
    %v2125 = vpop.f32.mrb[0].mxu0
    %v2126 = vadd.f32 %v2029, %v2125
    %v2127 = vpop.f32.mrb[0].mxu0
    %v2128 = vpop.f32.mrb[0].mxu0
    %v2129 = vadd.f32 %v2032, %v2128
    %v2130 = vpop.f32.mrb[0].mxu0
    %2131 = vmatprep.mubr.bf16.mxu0 %v942
    %2132 = vmatmul.mubr.bf16.gmra.mrb[0].mxu0 %v941
    %v2133 = vpop.f32.mrb[0].mxu0
    %v2134 = vadd.f32 %v2037, %v2133
    %v2135 = vpop.f32.mrb[0].mxu0
    %v2136 = vpop.f32.mrb[0].mxu0
    %v2137 = vadd.f32 %v2040, %v2136
    %v2138 = vpop.f32.mrb[0].mxu0
    %2139 = vdwg.mxu0
    %2140 = vmatprep.subr.bf16.mxu0 0
    %2141 = vmatpush1.bf16.msra.mxu0 %v1641
    %2142 = vmatprep.subr.bf16.mxu0 0
    %2143 = vmatpush1.bf16.msra.mxu0 %v1642
    %2144 = vmatprep.subr.bf16.mxu0 0
    %2145 = vmatpush1.bf16.msra.mxu0 %v1643
    %2146 = vmatprep.subr.bf16.mxu0 0
    %2147 = vmatpush1.bf16.msra.mxu0 %v1644
    %2148 = vmatprep.subr.bf16.mxu0 0
    %2149 = vmatpush1.bf16.msra.mxu0 %v1645
    %2150 = vmatprep.subr.bf16.mxu0 0
    %2151 = vmatpush1.bf16.msra.mxu0 %v1646
    %2152 = vmatprep.subr.bf16.mxu0 0
    %2153 = vmatpush1.bf16.msra.mxu0 %v1647
    %2154 = vmatprep.subr.bf16.mxu0 0
    %2155 = vmatpush1.bf16.msra.mxu0 %v1648
    %2156 = vmatprep.subr.bf16.mxu0 0
    %2157 = vmatpush1.bf16.msra.mxu0 %v1649
    %2158 = vmatprep.subr.bf16.mxu0 0
    %2159 = vmatpush1.bf16.msra.mxu0 %v1650
    %2160 = vmatprep.subr.bf16.mxu0 0
    %2161 = vmatpush1.bf16.msra.mxu0 %v1651
    %2162 = vmatprep.subr.bf16.mxu0 0
    %2163 = vmatpush1.bf16.msra.mxu0 %v1652
    %2164 = vmatprep.subr.bf16.mxu0 0
    %2165 = vmatpush1.bf16.msra.mxu0 %v1653
    %2166 = vmatprep.subr.bf16.mxu0 0
    %2167 = vmatpush1.bf16.msra.mxu0 %v1654
    %2168 = vmatprep.subr.bf16.mxu0 0
    %2169 = vmatpush1.bf16.msra.mxu0 %v1655
    %2170 = vmatprep.subr.bf16.mxu0 0
    %2171 = vmatpush1.bf16.msra.mxu0 %v1656
    %2172 = vmatprep.mubr.bf16.mxu0 %v832
    %2173 = vmatmul.mubr.bf16.gmra.mrb[0].mxu0 %v831
    %v2174 = vpop.f32.mrb[0].mxu0
    %v2175 = vadd.f32 %v2078, %v2174
    %v2176 = vpop.f32.mrb[0].mxu0
    %v2177 = vpop.f32.mrb[0].mxu0
    %v2178 = vadd.f32 %v2081, %v2177
    %v2179 = vpop.f32.mrb[0].mxu0
    %2180 = vmatprep.mubr.bf16.mxu0 %v848
    %2181 = vmatmul.mubr.bf16.gmra.mrb[0].mxu0 %v847
    %v2182 = vpop.f32.mrb[0].mxu0
    %v2183 = vadd.f32 %v2086, %v2182
    %v2184 = vpop.f32.mrb[0].mxu0
    %v2185 = vpop.f32.mrb[0].mxu0
    %v2186 = vadd.f32 %v2089, %v2185
    %v2187 = vpop.f32.mrb[0].mxu0
    %2188 = vmatprep.mubr.bf16.mxu0 %v864
    %2189 = vmatmul.mubr.bf16.gmra.mrb[0].mxu0 %v863
    %v2190 = vpop.f32.mrb[0].mxu0
    %v2191 = vadd.f32 %v2094, %v2190
    %v2192 = vpop.f32.mrb[0].mxu0
    %v2193 = vpop.f32.mrb[0].mxu0
    %v2194 = vadd.f32 %v2097, %v2193
    %v2195 = vpop.f32.mrb[0].mxu0
    %2196 = vmatprep.mubr.bf16.mxu0 %v880
    %2197 = vmatmul.mubr.bf16.gmra.mrb[0].mxu0 %v879
    %v2198 = vpop.f32.mrb[0].mxu0
    %v2199 = vadd.f32 %v2102, %v2198
    %v2200 = vpop.f32.mrb[0].mxu0
    %v2201 = vpop.f32.mrb[0].mxu0
    %v2202 = vadd.f32 %v2105, %v2201
    %v2203 = vpop.f32.mrb[0].mxu0
    %2204 = vmatprep.mubr.bf16.mxu0 %v896
    %2205 = vmatmul.mubr.bf16.gmra.mrb[0].mxu0 %v895
    %v2206 = vpop.f32.mrb[0].mxu0
    %v2207 = vadd.f32 %v2110, %v2206
    %v2208 = vpop.f32.mrb[0].mxu0
    %v2209 = vpop.f32.mrb[0].mxu0
    %v2210 = vadd.f32 %v2113, %v2209
    %v2211 = vpop.f32.mrb[0].mxu0
    %2212 = vmatprep.mubr.bf16.mxu0 %v912
    %2213 = vmatmul.mubr.bf16.gmra.mrb[0].mxu0 %v911
    %v2214 = vpop.f32.mrb[0].mxu0
    %v2215 = vadd.f32 %v2118, %v2214
    %v2216 = vpop.f32.mrb[0].mxu0
    %v2217 = vpop.f32.mrb[0].mxu0
    %v2218 = vadd.f32 %v2121, %v2217
    %v2219 = vpop.f32.mrb[0].mxu0
    %2220 = vmatprep.mubr.bf16.mxu0 %v928
    %2221 = vmatmul.mubr.bf16.gmra.mrb[0].mxu0 %v927
    %v2222 = vpop.f32.mrb[0].mxu0
    %v2223 = vadd.f32 %v2126, %v2222
    %v2224 = vpop.f32.mrb[0].mxu0
    %v2225 = vpop.f32.mrb[0].mxu0
    %v2226 = vadd.f32 %v2129, %v2225
    %v2227 = vpop.f32.mrb[0].mxu0
    %2228 = vmatprep.mubr.bf16.mxu0 %v944
    %2229 = vmatmul.mubr.bf16.gmra.mrb[0].mxu0 %v943
    %v2230 = vpop.f32.mrb[0].mxu0
    %v2231 = vadd.f32 %v2134, %v2230
    %v2232 = vpop.f32.mrb[0].mxu0
    %v2233 = vpop.f32.mrb[0].mxu0
    %v2234 = vadd.f32 %v2137, %v2233
    %v2235 = vpop.f32.mrb[0].mxu0
    %2236 = vdwg.mxu0
    %2237 = vmatprep.subr.bf16.mxu0 0
    %2238 = vmatpush1.bf16.msra.mxu0 %v1657
    %2239 = vmatprep.subr.bf16.mxu0 0
    %2240 = vmatpush1.bf16.msra.mxu0 %v1658
    %2241 = vmatprep.subr.bf16.mxu0 0
    %2242 = vmatpush1.bf16.msra.mxu0 %v1659
    %2243 = vmatprep.subr.bf16.mxu0 0
    %2244 = vmatpush1.bf16.msra.mxu0 %v1660
    %2245 = vmatprep.subr.bf16.mxu0 0
    %2246 = vmatpush1.bf16.msra.mxu0 %v1661
    %2247 = vmatprep.subr.bf16.mxu0 0
    %2248 = vmatpush1.bf16.msra.mxu0 %v1662
    %2249 = vmatprep.subr.bf16.mxu0 0
    %2250 = vmatpush1.bf16.msra.mxu0 %v1663
    %2251 = vmatprep.subr.bf16.mxu0 0
    %2252 = vmatpush1.bf16.msra.mxu0 %v1664
    %2253 = vmatprep.subr.bf16.mxu0 0
    %2254 = vmatpush1.bf16.msra.mxu0 %v1665
    %2255 = vmatprep.subr.bf16.mxu0 0
    %2256 = vmatpush1.bf16.msra.mxu0 %v1666
    %2257 = vmatprep.subr.bf16.mxu0 0
    %2258 = vmatpush1.bf16.msra.mxu0 %v1667
    %2259 = vmatprep.subr.bf16.mxu0 0
    %2260 = vmatpush1.bf16.msra.mxu0 %v1668
    %2261 = vmatprep.subr.bf16.mxu0 0
    %2262 = vmatpush1.bf16.msra.mxu0 %v1669
    %2263 = vmatprep.subr.bf16.mxu0 0
    %2264 = vmatpush1.bf16.msra.mxu0 %v1670
    %2265 = vmatprep.subr.bf16.mxu0 0
    %2266 = vmatpush1.bf16.msra.mxu0 %v1671
    %2267 = vmatprep.subr.bf16.mxu0 0
    %2268 = vmatpush1.bf16.msra.mxu0 %v1672
    %2269 = vmatprep.mubr.bf16.mxu0 %v834
    %2270 = vmatmul.mubr.bf16.gmra.mrb[0].mxu0 %v833
    %v2271 = vpop.f32.mrb[0].mxu0
    %v2272 = vadd.f32 %v2175, %v2271
    %v2273 = vpop.f32.mrb[0].mxu0
    %v2274 = vpop.f32.mrb[0].mxu0
    %v2275 = vadd.f32 %v2178, %v2274
    %v2276 = vpop.f32.mrb[0].mxu0
    %2277 = vmatprep.mubr.bf16.mxu0 %v850
    %2278 = vmatmul.mubr.bf16.gmra.mrb[0].mxu0 %v849
    %v2279 = vpop.f32.mrb[0].mxu0
    %v2280 = vadd.f32 %v2183, %v2279
    %v2281 = vpop.f32.mrb[0].mxu0
    %v2282 = vpop.f32.mrb[0].mxu0
    %v2283 = vadd.f32 %v2186, %v2282
    %v2284 = vpop.f32.mrb[0].mxu0
    %2285 = vmatprep.mubr.bf16.mxu0 %v866
    %2286 = vmatmul.mubr.bf16.gmra.mrb[0].mxu0 %v865
    %v2287 = vpop.f32.mrb[0].mxu0
    %v2288 = vadd.f32 %v2191, %v2287
    %v2289 = vpop.f32.mrb[0].mxu0
    %v2290 = vpop.f32.mrb[0].mxu0
    %v2291 = vadd.f32 %v2194, %v2290
    %v2292 = vpop.f32.mrb[0].mxu0
    %2293 = vmatprep.mubr.bf16.mxu0 %v882
    %2294 = vmatmul.mubr.bf16.gmra.mrb[0].mxu0 %v881
    %v2295 = vpop.f32.mrb[0].mxu0
    %v2296 = vadd.f32 %v2199, %v2295
    %v2297 = vpop.f32.mrb[0].mxu0
    %v2298 = vpop.f32.mrb[0].mxu0
    %v2299 = vadd.f32 %v2202, %v2298
    %v2300 = vpop.f32.mrb[0].mxu0
    %2301 = vmatprep.mubr.bf16.mxu0 %v898
    %2302 = vmatmul.mubr.bf16.gmra.mrb[0].mxu0 %v897
    %v2303 = vpop.f32.mrb[0].mxu0
    %v2304 = vadd.f32 %v2207, %v2303
    %v2305 = vpop.f32.mrb[0].mxu0
    %v2306 = vpop.f32.mrb[0].mxu0
    %v2307 = vadd.f32 %v2210, %v2306
    %v2308 = vpop.f32.mrb[0].mxu0
    %2309 = vmatprep.mubr.bf16.mxu0 %v914
    %2310 = vmatmul.mubr.bf16.gmra.mrb[0].mxu0 %v913
    %v2311 = vpop.f32.mrb[0].mxu0
    %v2312 = vadd.f32 %v2215, %v2311
    %v2313 = vpop.f32.mrb[0].mxu0
    %v2314 = vpop.f32.mrb[0].mxu0
    %v2315 = vadd.f32 %v2218, %v2314
    %v2316 = vpop.f32.mrb[0].mxu0
    %2317 = vmatprep.mubr.bf16.mxu0 %v930
    %2318 = vmatmul.mubr.bf16.gmra.mrb[0].mxu0 %v929
    %v2319 = vpop.f32.mrb[0].mxu0
    %v2320 = vadd.f32 %v2223, %v2319
    %v2321 = vpop.f32.mrb[0].mxu0
    %v2322 = vpop.f32.mrb[0].mxu0
    %v2323 = vadd.f32 %v2226, %v2322
    %v2324 = vpop.f32.mrb[0].mxu0
    %2325 = vmatprep.mubr.bf16.mxu0 %v946
    %2326 = vmatmul.mubr.bf16.gmra.mrb[0].mxu0 %v945
    %v2327 = vpop.f32.mrb[0].mxu0
    %v2328 = vadd.f32 %v2231, %v2327
    %v2329 = vpop.f32.mrb[0].mxu0
    %v2330 = vpop.f32.mrb[0].mxu0
    %v2331 = vadd.f32 %v2234, %v2330
    %v2332 = vpop.f32.mrb[0].mxu0
    %2333 = vdwg.mxu0
    %2334 = vmatprep.subr.bf16.mxu0 0
    %2335 = vmatpush1.bf16.msra.mxu0 %v1673
    %2336 = vmatprep.subr.bf16.mxu0 0
    %2337 = vmatpush1.bf16.msra.mxu0 %v1674
    %2338 = vmatprep.subr.bf16.mxu0 0
    %2339 = vmatpush1.bf16.msra.mxu0 %v1675
    %2340 = vmatprep.subr.bf16.mxu0 0
    %2341 = vmatpush1.bf16.msra.mxu0 %v1676
    %2342 = vmatprep.subr.bf16.mxu0 0
    %2343 = vmatpush1.bf16.msra.mxu0 %v1677
    %2344 = vmatprep.subr.bf16.mxu0 0
    %2345 = vmatpush1.bf16.msra.mxu0 %v1678
    %2346 = vmatprep.subr.bf16.mxu0 0
    %2347 = vmatpush1.bf16.msra.mxu0 %v1679
    %2348 = vmatprep.subr.bf16.mxu0 0
    %2349 = vmatpush1.bf16.msra.mxu0 %v1680
    %2350 = vmatprep.subr.bf16.mxu0 0
    %2351 = vmatpush1.bf16.msra.mxu0 %v1681
    %2352 = vmatprep.subr.bf16.mxu0 0
    %2353 = vmatpush1.bf16.msra.mxu0 %v1682
    %2354 = vmatprep.subr.bf16.mxu0 0
    %2355 = vmatpush1.bf16.msra.mxu0 %v1683
    %2356 = vmatprep.subr.bf16.mxu0 0
    %2357 = vmatpush1.bf16.msra.mxu0 %v1684
    %2358 = vmatprep.subr.bf16.mxu0 0
    %2359 = vmatpush1.bf16.msra.mxu0 %v1685
    %2360 = vmatprep.subr.bf16.mxu0 0
    %2361 = vmatpush1.bf16.msra.mxu0 %v1686
    %2362 = vmatprep.subr.bf16.mxu0 0
    %2363 = vmatpush1.bf16.msra.mxu0 %v1687
    %2364 = vmatprep.subr.bf16.mxu0 0
    %2365 = vmatpush1.bf16.msra.mxu0 %v1688
    %2366 = vmatprep.mubr.bf16.mxu0 %v836
    %2367 = vmatmul.mubr.bf16.gmra.mrb[0].mxu0 %v835
    %v2368 = vpop.f32.mrb[0].mxu0
    %v2369 = vadd.f32 %v2272, %v2368
    %v2370 = vpop.f32.mrb[0].mxu0
    %v2371 = vpop.f32.mrb[0].mxu0
    %v2372 = vadd.f32 %v2275, %v2371
    %v2373 = vpop.f32.mrb[0].mxu0
    %2374 = vmatprep.mubr.bf16.mxu0 %v852
    %2375 = vmatmul.mubr.bf16.gmra.mrb[0].mxu0 %v851
    %v2376 = vpop.f32.mrb[0].mxu0
    %v2377 = vadd.f32 %v2280, %v2376
    %v2378 = vpop.f32.mrb[0].mxu0
    %v2379 = vpop.f32.mrb[0].mxu0
    %v2380 = vadd.f32 %v2283, %v2379
    %v2381 = vpop.f32.mrb[0].mxu0
    %2382 = vmatprep.mubr.bf16.mxu0 %v868
    %2383 = vmatmul.mubr.bf16.gmra.mrb[0].mxu0 %v867
    %v2384 = vpop.f32.mrb[0].mxu0
    %v2385 = vadd.f32 %v2288, %v2384
    %v2386 = vpop.f32.mrb[0].mxu0
    %v2387 = vpop.f32.mrb[0].mxu0
    %v2388 = vadd.f32 %v2291, %v2387
    %v2389 = vpop.f32.mrb[0].mxu0
    %2390 = vmatprep.mubr.bf16.mxu0 %v884
    %2391 = vmatmul.mubr.bf16.gmra.mrb[0].mxu0 %v883
    %v2392 = vpop.f32.mrb[0].mxu0
    %v2393 = vadd.f32 %v2296, %v2392
    %v2394 = vpop.f32.mrb[0].mxu0
    %v2395 = vpop.f32.mrb[0].mxu0
    %v2396 = vadd.f32 %v2299, %v2395
    %v2397 = vpop.f32.mrb[0].mxu0
    %2398 = vmatprep.mubr.bf16.mxu0 %v900
    %2399 = vmatmul.mubr.bf16.gmra.mrb[0].mxu0 %v899
    %v2400 = vpop.f32.mrb[0].mxu0
    %v2401 = vadd.f32 %v2304, %v2400
    %v2402 = vpop.f32.mrb[0].mxu0
    %v2403 = vpop.f32.mrb[0].mxu0
    %v2404 = vadd.f32 %v2307, %v2403
    %v2405 = vpop.f32.mrb[0].mxu0
    %2406 = vmatprep.mubr.bf16.mxu0 %v916
    %2407 = vmatmul.mubr.bf16.gmra.mrb[0].mxu0 %v915
    %v2408 = vpop.f32.mrb[0].mxu0
    %v2409 = vadd.f32 %v2312, %v2408
    %v2410 = vpop.f32.mrb[0].mxu0
    %v2411 = vpop.f32.mrb[0].mxu0
    %v2412 = vadd.f32 %v2315, %v2411
    %v2413 = vpop.f32.mrb[0].mxu0
    %2414 = vmatprep.mubr.bf16.mxu0 %v932
    %2415 = vmatmul.mubr.bf16.gmra.mrb[0].mxu0 %v931
    %v2416 = vpop.f32.mrb[0].mxu0
    %v2417 = vadd.f32 %v2320, %v2416
    %v2418 = vpop.f32.mrb[0].mxu0
    %v2419 = vpop.f32.mrb[0].mxu0
    %v2420 = vadd.f32 %v2323, %v2419
    %v2421 = vpop.f32.mrb[0].mxu0
    %2422 = vmatprep.mubr.bf16.mxu0 %v948
    %2423 = vmatmul.mubr.bf16.gmra.mrb[0].mxu0 %v947
    %v2424 = vpop.f32.mrb[0].mxu0
    %v2425 = vadd.f32 %v2328, %v2424
    %v2426 = vpop.f32.mrb[0].mxu0
    %v2427 = vpop.f32.mrb[0].mxu0
    %v2428 = vadd.f32 %v2331, %v2427
    %v2429 = vpop.f32.mrb[0].mxu0
    %2430 = vdwg.mxu0
    %2431 = vmatprep.subr.bf16.mxu0 0
    %2432 = vmatpush1.bf16.msra.mxu0 %v1689
    %2433 = vmatprep.subr.bf16.mxu0 0
    %2434 = vmatpush1.bf16.msra.mxu0 %v1690
    %2435 = vmatprep.subr.bf16.mxu0 0
    %2436 = vmatpush1.bf16.msra.mxu0 %v1691
    %2437 = vmatprep.subr.bf16.mxu0 0
    %2438 = vmatpush1.bf16.msra.mxu0 %v1692
    %2439 = vmatprep.subr.bf16.mxu0 0
    %2440 = vmatpush1.bf16.msra.mxu0 %v1693
    %2441 = vmatprep.subr.bf16.mxu0 0
    %2442 = vmatpush1.bf16.msra.mxu0 %v1694
    %2443 = vmatprep.subr.bf16.mxu0 0
    %2444 = vmatpush1.bf16.msra.mxu0 %v1695
    %2445 = vmatprep.subr.bf16.mxu0 0
    %2446 = vmatpush1.bf16.msra.mxu0 %v1696
    %2447 = vmatprep.subr.bf16.mxu0 0
    %2448 = vmatpush1.bf16.msra.mxu0 %v1697
    %2449 = vmatprep.subr.bf16.mxu0 0
    %2450 = vmatpush1.bf16.msra.mxu0 %v1698
    %2451 = vmatprep.subr.bf16.mxu0 0
    %2452 = vmatpush1.bf16.msra.mxu0 %v1699
    %2453 = vmatprep.subr.bf16.mxu0 0
    %2454 = vmatpush1.bf16.msra.mxu0 %v1700
    %2455 = vmatprep.subr.bf16.mxu0 0
    %2456 = vmatpush1.bf16.msra.mxu0 %v1701
    %2457 = vmatprep.subr.bf16.mxu0 0
    %2458 = vmatpush1.bf16.msra.mxu0 %v1702
    %2459 = vmatprep.subr.bf16.mxu0 0
    %2460 = vmatpush1.bf16.msra.mxu0 %v1703
    %2461 = vmatprep.subr.bf16.mxu0 0
    %2462 = vmatpush1.bf16.msra.mxu0 %v1704
    %2463 = vmatprep.mubr.bf16.mxu0 %v838
    %2464 = vmatmul.mubr.bf16.gmra.mrb[0].mxu0 %v837
    %v2465 = vpop.f32.mrb[0].mxu0
    %v2466 = vadd.f32 %v2369, %v2465
    %v2467 = vpop.f32.mrb[0].mxu0
    %v2468 = vpop.f32.mrb[0].mxu0
    %v2469 = vadd.f32 %v2372, %v2468
    %v2470 = vpop.f32.mrb[0].mxu0
    %2471 = vmatprep.mubr.bf16.mxu0 %v854
    %2472 = vmatmul.mubr.bf16.gmra.mrb[0].mxu0 %v853
    %v2473 = vpop.f32.mrb[0].mxu0
    %v2474 = vadd.f32 %v2377, %v2473
    %v2475 = vpop.f32.mrb[0].mxu0
    %v2476 = vpop.f32.mrb[0].mxu0
    %v2477 = vadd.f32 %v2380, %v2476
    %v2478 = vpop.f32.mrb[0].mxu0
    %2479 = vmatprep.mubr.bf16.mxu0 %v870
    %2480 = vmatmul.mubr.bf16.gmra.mrb[0].mxu0 %v869
    %v2481 = vpop.f32.mrb[0].mxu0
    %v2482 = vadd.f32 %v2385, %v2481
    %v2483 = vpop.f32.mrb[0].mxu0
    %v2484 = vpop.f32.mrb[0].mxu0
    %v2485 = vadd.f32 %v2388, %v2484
    %v2486 = vpop.f32.mrb[0].mxu0
    %2487 = vmatprep.mubr.bf16.mxu0 %v886
    %2488 = vmatmul.mubr.bf16.gmra.mrb[0].mxu0 %v885
    %v2489 = vpop.f32.mrb[0].mxu0
    %v2490 = vadd.f32 %v2393, %v2489
    %v2491 = vpop.f32.mrb[0].mxu0
    %v2492 = vpop.f32.mrb[0].mxu0
    %v2493 = vadd.f32 %v2396, %v2492
    %v2494 = vpop.f32.mrb[0].mxu0
    %2495 = vmatprep.mubr.bf16.mxu0 %v902
    %2496 = vmatmul.mubr.bf16.gmra.mrb[0].mxu0 %v901
    %v2497 = vpop.f32.mrb[0].mxu0
    %v2498 = vadd.f32 %v2401, %v2497
    %v2499 = vpop.f32.mrb[0].mxu0
    %v2500 = vpop.f32.mrb[0].mxu0
    %v2501 = vadd.f32 %v2404, %v2500
    %v2502 = vpop.f32.mrb[0].mxu0
    %2503 = vmatprep.mubr.bf16.mxu0 %v918
    %2504 = vmatmul.mubr.bf16.gmra.mrb[0].mxu0 %v917
    %v2505 = vpop.f32.mrb[0].mxu0
    %v2506 = vadd.f32 %v2409, %v2505
    %v2507 = vpop.f32.mrb[0].mxu0
    %v2508 = vpop.f32.mrb[0].mxu0
    %v2509 = vadd.f32 %v2412, %v2508
    %v2510 = vpop.f32.mrb[0].mxu0
    %2511 = vmatprep.mubr.bf16.mxu0 %v934
    %2512 = vmatmul.mubr.bf16.gmra.mrb[0].mxu0 %v933
    %v2513 = vpop.f32.mrb[0].mxu0
    %v2514 = vadd.f32 %v2417, %v2513
    %v2515 = vpop.f32.mrb[0].mxu0
    %v2516 = vpop.f32.mrb[0].mxu0
    %v2517 = vadd.f32 %v2420, %v2516
    %v2518 = vpop.f32.mrb[0].mxu0
    %2519 = vmatprep.mubr.bf16.mxu0 %v950
    %2520 = vmatmul.mubr.bf16.gmra.mrb[0].mxu0 %v949
    %v2521 = vpop.f32.mrb[0].mxu0
    %v2522 = vadd.f32 %v2425, %v2521
    %v2523 = vpop.f32.mrb[0].mxu0
    %v2524 = vpop.f32.mrb[0].mxu0
    %v2525 = vadd.f32 %v2428, %v2524
    %v2526 = vpop.f32.mrb[0].mxu0
    %2527 = vdwg.mxu0
    %2528 = vmatprep.subr.bf16.mxu0 0
    %2529 = vmatpush1.bf16.msra.mxu0 %v1705
    %2530 = vmatprep.subr.bf16.mxu0 0
    %2531 = vmatpush1.bf16.msra.mxu0 %v1706
    %2532 = vmatprep.subr.bf16.mxu0 0
    %2533 = vmatpush1.bf16.msra.mxu0 %v1707
    %2534 = vmatprep.subr.bf16.mxu0 0
    %2535 = vmatpush1.bf16.msra.mxu0 %v1708
    %2536 = vmatprep.subr.bf16.mxu0 0
    %2537 = vmatpush1.bf16.msra.mxu0 %v1709
    %2538 = vmatprep.subr.bf16.mxu0 0
    %2539 = vmatpush1.bf16.msra.mxu0 %v1710
    %2540 = vmatprep.subr.bf16.mxu0 0
    %2541 = vmatpush1.bf16.msra.mxu0 %v1711
    %2542 = vmatprep.subr.bf16.mxu0 0
    %2543 = vmatpush1.bf16.msra.mxu0 %v1712
    %2544 = vmatprep.subr.bf16.mxu0 0
    %2545 = vmatpush1.bf16.msra.mxu0 %v1713
    %2546 = vmatprep.subr.bf16.mxu0 0
    %2547 = vmatpush1.bf16.msra.mxu0 %v1714
    %2548 = vmatprep.subr.bf16.mxu0 0
    %2549 = vmatpush1.bf16.msra.mxu0 %v1715
    %2550 = vmatprep.subr.bf16.mxu0 0
    %2551 = vmatpush1.bf16.msra.mxu0 %v1716
    %2552 = vmatprep.subr.bf16.mxu0 0
    %2553 = vmatpush1.bf16.msra.mxu0 %v1717
    %2554 = vmatprep.subr.bf16.mxu0 0
    %2555 = vmatpush1.bf16.msra.mxu0 %v1718
    %2556 = vmatprep.subr.bf16.mxu0 0
    %2557 = vmatpush1.bf16.msra.mxu0 %v1719
    %2558 = vmatprep.subr.bf16.mxu0 0
    %2559 = vmatpush1.bf16.msra.mxu0 %v1720
    %2560 = vmatprep.mubr.bf16.mxu0 %v840
    %2561 = vmatmul.mubr.bf16.gmra.mrb[0].mxu0 %v839
    %v2562 = vpop.f32.mrb[0].mxu0
    %v2563 = vadd.f32 %v2466, %v2562
    %v2564 = vpop.f32.mrb[0].mxu0
    %v2565 = vpop.f32.mrb[0].mxu0
    %v2566 = vadd.f32 %v2469, %v2565
    %v2567 = vpop.f32.mrb[0].mxu0
    %2568 = vmatprep.mubr.bf16.mxu0 %v856
    %2569 = vmatmul.mubr.bf16.gmra.mrb[0].mxu0 %v855
    %v2570 = vpop.f32.mrb[0].mxu0
    %v2571 = vadd.f32 %v2474, %v2570
    %v2572 = vpop.f32.mrb[0].mxu0
    %v2573 = vpop.f32.mrb[0].mxu0
    %v2574 = vadd.f32 %v2477, %v2573
    %v2575 = vpop.f32.mrb[0].mxu0
    %2576 = vmatprep.mubr.bf16.mxu0 %v872
    %2577 = vmatmul.mubr.bf16.gmra.mrb[0].mxu0 %v871
    %v2578 = vpop.f32.mrb[0].mxu0
    %v2579 = vadd.f32 %v2482, %v2578
    %v2580 = vpop.f32.mrb[0].mxu0
    %v2581 = vpop.f32.mrb[0].mxu0
    %v2582 = vadd.f32 %v2485, %v2581
    %v2583 = vpop.f32.mrb[0].mxu0
    %2584 = vmatprep.mubr.bf16.mxu0 %v888
    %2585 = vmatmul.mubr.bf16.gmra.mrb[0].mxu0 %v887
    %v2586 = vpop.f32.mrb[0].mxu0
    %v2587 = vadd.f32 %v2490, %v2586
    %v2588 = vpop.f32.mrb[0].mxu0
    %v2589 = vpop.f32.mrb[0].mxu0
    %v2590 = vadd.f32 %v2493, %v2589
    %v2591 = vpop.f32.mrb[0].mxu0
    %2592 = vmatprep.mubr.bf16.mxu0 %v904
    %2593 = vmatmul.mubr.bf16.gmra.mrb[0].mxu0 %v903
    %v2594 = vpop.f32.mrb[0].mxu0
    %v2595 = vadd.f32 %v2498, %v2594
    %v2596 = vpop.f32.mrb[0].mxu0
    %v2597 = vpop.f32.mrb[0].mxu0
    %v2598 = vadd.f32 %v2501, %v2597
    %v2599 = vpop.f32.mrb[0].mxu0
    %2600 = vmatprep.mubr.bf16.mxu0 %v920
    %2601 = vmatmul.mubr.bf16.gmra.mrb[0].mxu0 %v919
    %v2602 = vpop.f32.mrb[0].mxu0
    %v2603 = vadd.f32 %v2506, %v2602
    %v2604 = vpop.f32.mrb[0].mxu0
    %v2605 = vpop.f32.mrb[0].mxu0
    %v2606 = vadd.f32 %v2509, %v2605
    %v2607 = vpop.f32.mrb[0].mxu0
    %2608 = vmatprep.mubr.bf16.mxu0 %v936
    %2609 = vmatmul.mubr.bf16.gmra.mrb[0].mxu0 %v935
    %v2610 = vpop.f32.mrb[0].mxu0
    %v2611 = vadd.f32 %v2514, %v2610
    %v2612 = vpop.f32.mrb[0].mxu0
    %v2613 = vpop.f32.mrb[0].mxu0
    %v2614 = vadd.f32 %v2517, %v2613
    %v2615 = vpop.f32.mrb[0].mxu0
    %2616 = vmatprep.mubr.bf16.mxu0 %v952
    %2617 = vmatmul.mubr.bf16.gmra.mrb[0].mxu0 %v951
    %v2618 = vpop.f32.mrb[0].mxu0
    %v2619 = vadd.f32 %v2522, %v2618
    %v2620 = vpop.f32.mrb[0].mxu0
    %v2621 = vpop.f32.mrb[0].mxu0
    %v2622 = vadd.f32 %v2525, %v2621
    %v2623 = vpop.f32.mrb[0].mxu0
    %2624 = vdwg.mxu0
    %v2625 = vmax.f32 %v2563, 0.0
    %v2626 = vmax.f32 %v2566, 0.0
    %v2627 = vmax.f32 %v2571, 0.0
    %v2628 = vmax.f32 %v2574, 0.0
    %v2629 = vmax.f32 %v2579, 0.0
    %v2630 = vmax.f32 %v2582, 0.0
    %v2631 = vmax.f32 %v2587, 0.0
    %v2632 = vmax.f32 %v2590, 0.0
    %v2633 = vmax.f32 %v2595, 0.0
    %v2634 = vmax.f32 %v2598, 0.0
    %v2635 = vmax.f32 %v2603, 0.0
    %v2636 = vmax.f32 %v2606, 0.0
    %v2637 = vmax.f32 %v2611, 0.0
    %v2638 = vmax.f32 %v2614, 0.0
    %v2639 = vmax.f32 %v2619, 0.0
    %v2640 = vmax.f32 %v2622, 0.0
    %v2641 = vld [vmem:[%s3] sm:$0xff]
    %v2642 = vld [vmem:[%s4] sm:$0x1]
    %v2644 = vlaneseq
    %v2645 = vshrl.u32 %v2644, 7
    %v2646 = vsub.s32 0, %v2645
    %v2647 = vrot.slane %v2642, %v2646
    %v2649 = vmul.f32 %v2641, %v2647
    %v2650 = vpack.c.bf16 %v2649, %v2649
    %v2651 = vpack.c.bf16 %v2626, %v2625
    %v2652 = vpack.c.bf16 %v2628, %v2627
    %v2653 = vpack.c.bf16 %v2630, %v2629
    %v2654 = vpack.c.bf16 %v2632, %v2631
    %v2655 = vpack.c.bf16 %v2634, %v2633
    %v2656 = vpack.c.bf16 %v2636, %v2635
    %v2657 = vpack.c.bf16 %v2638, %v2637
    %v2658 = vpack.c.bf16 %v2640, %v2639
    %2659 = vmatprep.subr.bf16.mxu0 0
    %2660 = vmatpush1.bf16.xpose.msra.mxu0 %v2651
    %2661 = vmatprep.subr.bf16.mxu0 0
    %2662 = vmatpush1.bf16.xpose.msra.mxu0 %v2652
    %2663 = vmatprep.subr.bf16.mxu0 0
    %2664 = vmatpush1.bf16.xpose.msra.mxu0 %v2653
    %2665 = vmatprep.subr.bf16.mxu0 0
    %2666 = vmatpush1.bf16.xpose.msra.mxu0 %v2654
    %2667 = vmatprep.subr.bf16.mxu0 0
    %2668 = vmatpush1.bf16.xpose.msra.mxu0 %v2655
    %2669 = vmatprep.subr.bf16.mxu0 0
    %2670 = vmatpush1.bf16.xpose.msra.mxu0 %v2656
    %2671 = vmatprep.subr.bf16.mxu0 0
    %2672 = vmatpush1.bf16.xpose.msra.mxu0 %v2657
    %2673 = vmatprep.subr.bf16.mxu0 0
    %2674 = vmatpush1.bf16.xpose.msra.mxu0 %v2658
    %2675 = vmatprep.subr.bf16.mxu0 0
    %2676 = vmatpush1.bf16.xpose.msra.mxu0 0
    %2677 = vmatprep.subr.bf16.mxu0 0
    %2678 = vmatpush1.bf16.xpose.msra.mxu0 0
    %2679 = vmatprep.subr.bf16.mxu0 0
    %2680 = vmatpush1.bf16.xpose.msra.mxu0 0
    %2681 = vmatprep.subr.bf16.mxu0 0
    %2682 = vmatpush1.bf16.xpose.msra.mxu0 0
    %2683 = vmatprep.subr.bf16.mxu0 0
    %2684 = vmatpush1.bf16.xpose.msra.mxu0 0
    %2685 = vmatprep.subr.bf16.mxu0 0
    %2686 = vmatpush1.bf16.xpose.msra.mxu0 0
    %2687 = vmatprep.subr.bf16.mxu0 0
    %2688 = vmatpush1.bf16.xpose.msra.mxu0 0
    %2689 = vmatprep.subr.bf16.mxu0 0
    %2690 = vmatpush1.bf16.xpose.msra.mxu0 0
    %2691 = vmatprep.mubr.bf16.mxu0 0
    %2692 = vmatmul.mubr.bf16.gmra.mrb[0].mxu0 %v2650
    %v2693 = vpop.f32.mrb[0].mxu0
    %v2694 = vadd.f32 0.0, %v2693
    %v2695 = vpop.f32.mrb[0].mxu0
    %v2696 = vpop.f32.mrb[0].mxu0
    %v2697 = vpop.f32.mrb[0].mxu0
    %2698 = vdwg.mxu0
    %2699 = vst [vmem:[#allocation7] sm:$0xff] %v2694
    // Predicated region
    $region30: #{tpu_custom_call.1} parent=1 // pred_check
      _
    $region31: #{tpu_custom_call.1} parent=1 // pred_check_branch
      %2701 = sbr.rel (0) target = $region33
    $region32: #{tpu_custom_call.1} parent=1 // pred_region
      %s2703 = ssub.s32 128, 128
      %2704 = vsyncadd [#allocation4], %s2703
      %s2706 = sshll.u32 [#allocation7], 4
      %s2707 = int_to_ptr.vmem [resolvable:$true] %s2706
      %2709 = dma.vmem_to_hbm [thread:$0]  %s2707, 128, %s5, [#allocation4]
    $region33: #{tpu_custom_call.1} parent=1 // pred_fallthru
      _
    // Predicated region
    $region34: #{tpu_custom_call.1} parent=1 // pred_check
      _
    $region35: #{tpu_custom_call.1} parent=1 // pred_check_branch
      %2711 = sbr.rel (0) target = $region37
    $region36: #{tpu_custom_call.1} parent=1 // pred_region
      %2712 = dma.done [#allocation4], 128
    $region37: #{tpu_custom_call.1} parent=1 // pred_fallthru
      _
    %2713 = vsyncpa [#allocation3], 1
    %2714 = vsyncpa [#allocation6], 1
    %2715 = vsyncpa [#allocation4], 1

</llo_original>
